<compile_context>
chip_gen: v6e
topology: v6e:2x2x1
jax: 0.10.0
libtpu: 0.0.40
codegen_flags: <defaults>
</compile_context>

<pallas_src>
import jax
import jax.numpy as jnp
from jax import lax
from jax.experimental import pallas as pl
from jax.experimental.pallas import tpu as pltpu

LANE = 128


def _round_up(v, m):
    return ((v + m - 1) // m) * m


def _pad_feature(d):
    # Lane-dense columns; if >128 pad to a multiple of 256 so the 256-wide MXU
    # N dimension on v6e/v7x is filled (v5e's 128-wide MXU is full either way).
    return LANE if d <= LANE else _round_up(d, 2 * LANE)


def _choose_row_tile(n_p, budget_bytes=8 << 20):
    """Largest row tile (multiple of 128, <=512) whose double-buffered bf16
    adjacency block fits the budget.  If it equals Np the adjacency is DMA'd
    only once per view (fully fused path)."""
    tm = 512
    while tm > LANE and 2 * tm * n_p * 2 > budget_bytes:
        tm //= 2
    return min(tm, n_p)


# ----------------------------------------------------------------------------
# Pallas kernels
# ----------------------------------------------------------------------------
def fused_gcn_kernel(x_ref, a_ref, d_ref, w1_ref, b1_ref, w2_ref, b2_ref,
                     o_ref, dxw_ref, dhw_ref):
    """Row tile of one view of the 2-layer GCN encoder.

    Grid = (view, layer, row_tile).  Normalization D^-1/2 (A+I) D^-1/2 is
    applied as row scalings with the precomputed d (f32); the adjacency stays
    un-normalized bf16 (exact for 0/1 edges).  Layer pass 0 fills d*(X@W1)
    (once per view) and d*(H@W2) (tile-by-tile) into VMEM scratch; layer pass 1
    consumes the finished d*(H@W2) to emit output rows.  Padded rows have d=0,
    so they contribute nothing to either adjacency matmul.
    """
    layer = pl.program_id(1)
    tile = pl.program_id(2)
    tm = a_ref.shape[0]
    row0 = pl.multiple_of(tile * tm, tm)

    d_tile = d_ref[pl.ds(row0, tm), :]               # [tm, 1]  f32
    a_tile = a_ref[...]                              # [tm, Np] bf16

    @pl.when((layer == 0) & (tile == 0))
    def _():
        # d * (X @ W1) for the whole view, staged once as the layer-1 RHS.
        xw = jnp.dot(x_ref[...], w1_ref[...],
                     preferred_element_type=jnp.float32)      # [Np, Hp] f32
        dxw_ref[...] = (d_ref[...] * xw).astype(jnp.bfloat16)

    @pl.when(layer == 0)
    def _():
        # layer 1 rows: ReLU( d * (A @ d*(X W1)) + b1 )
        h = d_tile * jnp.dot(a_tile, dxw_ref[...],
                             preferred_element_type=jnp.float32) + b1_ref[...]
        h = jnp.maximum(h, 0.0)
        # stage d * (H @ W2) rows for layer pass 1
        hw = jnp.dot(h.astype(jnp.bfloat16), w2_ref[...],
                     preferred_element_type=jnp.float32)
        dhw_ref[pl.ds(row0, tm), :] = (d_tile * hw).astype(jnp.bfloat16)

    @pl.when(layer == 1)
    def _():
        # layer 2 rows: ReLU( d * (A @ d*(H W2)) + b2 )
        h2 = d_tile * jnp.dot(a_tile, dhw_ref[...],
                              preferred_element_type=jnp.float32) + b2_ref[...]
        o_ref[...] = jnp.maximum(h2, 0.0)


def project_kernel(z_ref, w1_ref, b1_ref, w2_ref, b2_ref, o_ref):
    """Encoder.project: fc2( ELU( fc1(z) ) ), fused, row-tiled."""
    h = jnp.dot(z_ref[...], w1_ref[...],
                preferred_element_type=jnp.float32) + b1_ref[...]
    # ELU(alpha=1): single exp on the clamped argument (no dead-branch overflow).
    h = jnp.where(h > 0.0, h, jnp.exp(jnp.minimum(h, 0.0)) - 1.0)
    o_ref[...] = (jnp.dot(h.astype(jnp.bfloat16), w2_ref[...],
                          preferred_element_type=jnp.float32) + b2_ref[...])


# ----------------------------------------------------------------------------
# Pallas wrappers
# ----------------------------------------------------------------------------
def fused_gcn_views(x_views, adj_views, d_views, w1, b1, w2, b2, *, tm):
    """Run all views of the 2-layer GCN in one row-tiled pallas_call.

    x_views  : [V, Np, Fp] bf16   padded node features per view
    adj_views: [V, Np, Np] bf16   padded adjacency (+I) per view, un-normalized
    d_views  : [V, Np, 1]  f32    D^-1/2 per view (padded rows -> 0)
    w1[Fp,Hp] b1[1,Hp] w2[Hp,Hp] b2[1,Hp]  (weights bf16, biases f32)
    returns  : [V, Np, Hp] f32
    """
    n_views, n_p, f_p = x_views.shape
    h_p = w1.shape[1]
    n_tiles = n_p // tm

    flops_per_view = (2 * n_p * f_p * h_p + 2 * n_p * h_p * h_p
                      + 4 * n_p * n_p * h_p)
    adj_passes = 1 if n_tiles == 1 else 2
    bytes_accessed = (n_views * adj_passes * n_p * n_p * 2   # adjacency bf16
                      + n_views * n_p * f_p * 2              # x bf16
                      + n_views * n_p * 4                    # d f32
                      + n_views * n_p * h_p * 4              # out f32
                      + (f_p * h_p + h_p * h_p) * 2 + 2 * h_p * 4)

    vmem_est = (2 * tm * n_p * 2          # adj (double-buffered, bf16)
                + 2 * n_p * f_p * 2       # x
                + 2 * n_p * 4             # d
                + 2 * (f_p + h_p) * h_p * 2 + 4 * h_p * 4
                + 2 * tm * h_p * 4        # out
                + 2 * n_p * h_p * 2       # dxw + dhw scratch
                + 2 * n_p * h_p * 4)      # in-kernel f32 intermediates
    vmem_limit = int(min(64 * 1024 * 1024, max(32 * 1024 * 1024, 2 * vmem_est)))

    return pl.pallas_call(
        fused_gcn_kernel,
        out_shape=jax.ShapeDtypeStruct((n_views, n_p, h_p), jnp.float32),
        grid=(n_views, 2, n_tiles),
        in_specs=[
            pl.BlockSpec((None, n_p, f_p), lambda v, l, t: (v, 0, 0)),   # x
            pl.BlockSpec((None, tm, n_p), lambda v, l, t: (v, t, 0)),    # adj tile
            pl.BlockSpec((None, n_p, 1), lambda v, l, t: (v, 0, 0)),     # d
            pl.BlockSpec((f_p, h_p), lambda v, l, t: (0, 0)),            # W1
            pl.BlockSpec((1, h_p), lambda v, l, t: (0, 0)),              # b1
            pl.BlockSpec((h_p, h_p), lambda v, l, t: (0, 0)),            # W2
            pl.BlockSpec((1, h_p), lambda v, l, t: (0, 0)),              # b2
        ],
        # during layer pass 0 the output block stays parked at (v, 0, 0) and is
        # fully overwritten at (v, layer=1, tile=0) before any writeback.
        out_specs=pl.BlockSpec((None, tm, h_p), lambda v, l, t: (v, t * l, 0)),
        scratch_shapes=[pltpu.VMEM((n_p, h_p), jnp.bfloat16),   # d*(X@W1)
                        pltpu.VMEM((n_p, h_p), jnp.bfloat16)],  # d*(H@W2)
        compiler_params=pltpu.CompilerParams(
            dimension_semantics=("parallel", "arbitrary", "arbitrary"),
            vmem_limit_bytes=vmem_limit),
        cost_estimate=pl.CostEstimate(
            flops=n_views * flops_per_view,
            transcendentals=0,
            bytes_accessed=bytes_accessed),
    )(x_views, adj_views, d_views, w1, b1, w2, b2)


def project(z, w1, b1, w2, b2, *, tm=256):
    """Encoder.project on the un-padded z; row-tiled, lane-dense padding."""
    n, h = z.shape
    p = w1.shape[1]
    h_p = _pad_feature(h)
    p_p = _pad_feature(p)
    n_p = _round_up(n, LANE)
    tm = min(tm, n_p)
    n_p = _round_up(n_p, tm)

    z_p = jnp.pad(z, ((0, n_p - n), (0, h_p - h))).astype(jnp.bfloat16)
    w1_p = jnp.pad(w1, ((0, h_p - h), (0, p_p - p))).astype(jnp.bfloat16)
    b1_p = jnp.pad(b1, ((0, p_p - p),)).reshape(1, -1)
    w2_p = jnp.pad(w2, ((0, p_p - p), (0, h_p - h))).astype(jnp.bfloat16)
    b2_p = jnp.pad(b2, ((0, h_p - h),)).reshape(1, -1)

    out = pl.pallas_call(
        project_kernel,
        out_shape=jax.ShapeDtypeStruct((n_p, h_p), jnp.float32),
        grid=(n_p // tm,),
        in_specs=[
            pl.BlockSpec((tm, h_p), lambda i: (i, 0)),     # z rows
            pl.BlockSpec((h_p, p_p), lambda i: (0, 0)),    # fc1 W (shared)
            pl.BlockSpec((1, p_p), lambda i: (0, 0)),      # fc1 b
            pl.BlockSpec((p_p, h_p), lambda i: (0, 0)),    # fc2 W (shared)
            pl.BlockSpec((1, h_p), lambda i: (0, 0)),      # fc2 b
        ],
        out_specs=pl.BlockSpec((tm, h_p), lambda i: (i, 0)),
        compiler_params=pltpu.CompilerParams(
            dimension_semantics=("parallel",),
            vmem_limit_bytes=32 * 1024 * 1024),
        cost_estimate=pl.CostEstimate(
            flops=4 * n_p * h_p * p_p,
            transcendentals=n_p * p_p,
            bytes_accessed=n_p * h_p * 2 + n_p * h_p * 4 + 2 * h_p * p_p * 2),
    )(z_p, w1_p, b1_p, w2_p, b2_p)
    return out[:n, :h]


# ----------------------------------------------------------------------------
# Glue: parameter init, graph densification, augmentors, forward
# ----------------------------------------------------------------------------
def init_linear(key, d_in, d_out):
    kw, kb = jax.random.split(key)
    bound = 1.0 / jnp.sqrt(jnp.float32(d_in))
    w = jax.random.uniform(kw, (d_in, d_out), jnp.float32, -bound, bound)
    b = jax.random.uniform(kb, (d_out,), jnp.float32, -bound, bound)
    return w, b


def edge_index_to_dense(edge_index, edge_weight, n):
    w = edge_weight if edge_weight is not None else jnp.ones(
        (edge_index.shape[1],), jnp.float32)
    a = jnp.zeros((n, n), jnp.float32)
    # NOTE: duplicate edges accumulate weight (small ints stay exact in bf16).
    return a.at[edge_index[0], edge_index[1]].add(w)


def encoder_forward(params, x, edge_index0, edge_index, edge_weight=None,
                    pe=0.3, pf=0.3, aug_key=None):
    """Mirrors Encoder.forward: returns (z, z1, z2, adj1, adj2)."""
    n, f = x.shape
    hidden = params["w_g1"].shape[1]
    a_dense = edge_index_to_dense(edge_index, edge_weight, n)

    k1, k2, k3, k4 = jax.random.split(aug_key, 4)
    # aug1 / aug2: EdgeRemoving(pe) + FeatureMasking(pf)
    keep_f1 = jax.random.bernoulli(k1, 1.0 - pf, (1, f)).astype(jnp.float32)
    keep_f2 = jax.random.bernoulli(k3, 1.0 - pf, (1, f)).astype(jnp.float32)
    a1_dense = a_dense * jax.random.bernoulli(
        k2, 1.0 - pe, a_dense.shape).astype(jnp.float32)
    a2_dense = a_dense * jax.random.bernoulli(
        k4, 1.0 - pe, a_dense.shape).astype(jnp.float32)

    # Stack the 3 views; self-loops added AFTER edge dropping (GCNConv behaviour).
    x_views = jnp.stack([x, x * keep_f1, x * keep_f2], axis=0)          # [3,N,F]
    eye = jnp.eye(n, dtype=jnp.float32)
    adj_views = jnp.stack([a_dense, a1_dense, a2_dense], axis=0) + eye  # [3,N,N]

    # Precompute D^-1/2 per view in f32 (padded rows stay 0 after padding).
    deg = jnp.sum(adj_views, axis=2, keepdims=True)
    d_views = jnp.where(deg > 0.0, lax.rsqrt(deg), 0.0)                 # [3,N,1]

    # Zero-pad to lane-dense / MXU-friendly shapes; cast matmul operands to bf16.
    f_p = _round_up(f, LANE)
    h_p = _pad_feature(hidden)
    n_p0 = _round_up(n, LANE)
    tm = _choose_row_tile(n_p0)
    n_p = _round_up(n_p0, tm)

    x_p = jnp.pad(x_views, ((0, 0), (0, n_p - n), (0, f_p - f))).astype(jnp.bfloat16)
    a_p = jnp.pad(adj_views, ((0, 0), (0, n_p - n), (0, n_p - n))).astype(jnp.bfloat16)
    d_p = jnp.pad(d_views, ((0, 0), (0, n_p - n), (0, 0)))
    w1_p = jnp.pad(params["w_g1"], ((0, f_p - f), (0, h_p - hidden))).astype(jnp.bfloat16)
    b1_p = jnp.pad(params["b_g1"], ((0, h_p - hidden),)).reshape(1, -1)
    w2_p = jnp.pad(params["w_g2"], ((0, h_p - hidden), (0, h_p - hidden))).astype(jnp.bfloat16)
    b2_p = jnp.pad(params["b_g2"], ((0, h_p - hidden),)).reshape(1, -1)

    z_all = fused_gcn_views(x_p, a_p, d_p, w1_p, b1_p, w2_p, b2_p, tm=tm)  # [3,Np,Hp]
    z = z_all[0, :n, :hidden]
    z1 = z_all[1, :n, :hidden]
    z2 = z_all[2, :n, :hidden]
    # TODO(synk): the PyTorch forward returns sparse edge_index1/edge_index2;
    # the dense augmented adjacencies are returned instead.
    return z, z1, z2, a1_dense, a2_dense


# ----------------------------------------------------------------------------
# main
# ----------------------------------------------------------------------------
if __name__ == "__main__":
    # small shapes: N nodes, input feature dim F, hidden_dim, proj_dim
    N, F_IN, HIDDEN, PROJ = 16, 8, 32, 16

    root = jax.random.PRNGKey(0)
    kx, ke, kg1, kg2, kf1, kf2, kaug = jax.random.split(root, 7)

    # deterministic inputs
    x = jax.random.normal(kx, (N, F_IN), jnp.float32)
    # random sparse-ish graph: 2*N directed edges
    src = jax.random.randint(ke, (2 * N,), 0, N)
    dst = jax.random.randint(jax.random.fold_in(ke, 1), (2 * N,), 0, N)
    edge_index = jnp.stack([src, dst], axis=0)       # [2, E]
    edge_weight = None

    # deterministic parameters
    w_g1, b_g1 = init_linear(kg1, F_IN, HIDDEN)      # encoder GCN layer 1
    w_g2, b_g2 = init_linear(kg2, HIDDEN, HIDDEN)    # encoder GCN layer 2
    w_fc1, b_fc1 = init_linear(kf1, HIDDEN, PROJ)    # Encoder.fc1
    w_fc2, b_fc2 = init_linear(kf2, PROJ, HIDDEN)    # Encoder.fc2
    params = dict(w_g1=w_g1, b_g1=b_g1, w_g2=w_g2, b_g2=b_g2)

    z, z1, z2, adj1, adj2 = encoder_forward(
        params, x, edge_index, edge_index, edge_weight, aug_key=kaug)
    p = project(z, w_fc1, b_fc1, w_fc2, b_fc2)        # Encoder.project(z)

    jax.block_until_ready((z, z1, z2, adj1, adj2, p))

    assert z.shape == (N, HIDDEN) and z1.shape == (N, HIDDEN) and z2.shape == (N, HIDDEN)
    assert p.shape == (N, HIDDEN)
    assert adj1.shape == (N, N) and adj2.shape == (N, N)
    assert bool(jnp.all(jnp.isfinite(z))) and bool(jnp.all(jnp.isfinite(p)))
    print("KERNEL_OK")
</pallas_src>

<mosaic_0001>
module attributes {stable_mosaic.version = 11 : i64} {
  func.func @fused_gcn_kernel(%arg0: i32, %arg1: i32, %arg2: i32, %arg3: memref<1x128x128xbf16, #tpu.memory_space<vmem>>, %arg4: memref<1x128x128xbf16, #tpu.memory_space<vmem>>, %arg5: memref<1x128x1xf32, #tpu.memory_space<vmem>>, %arg6: memref<128x128xbf16, #tpu.memory_space<vmem>>, %arg7: memref<1x128xf32, #tpu.memory_space<vmem>>, %arg8: memref<128x128xbf16, #tpu.memory_space<vmem>>, %arg9: memref<1x128xf32, #tpu.memory_space<vmem>>, %arg10: memref<1x128x128xf32, #tpu.memory_space<vmem>>, %arg11: memref<128x128xbf16, #tpu.memory_space<vmem>>, %arg12: memref<128x128xbf16, #tpu.memory_space<vmem>>) attributes {dimension_semantics = [#tpu.dimension_semantics<parallel>, #tpu.dimension_semantics<arbitrary>, #tpu.dimension_semantics<arbitrary>], iteration_bounds = array<i64: 3, 2, 1>, scalar_prefetch = 0 : i64, scratch_operands = 2 : i64, tpu.core_type = #tpu.core_type<tc>, window_params = [{transform_indices = @transform_0, window_bounds = array<i64: 1, 128, 128>}, {transform_indices = @transform_1, window_bounds = array<i64: 1, 128, 128>}, {transform_indices = @transform_2, window_bounds = array<i64: 1, 128, 1>}, {pipeline_mode = #tpu.pipeline_mode<synchronous>, transform_indices = @transform_3, window_bounds = array<i64: 128, 128>}, {pipeline_mode = #tpu.pipeline_mode<synchronous>, transform_indices = @transform_4, window_bounds = array<i64: 1, 128>}, {pipeline_mode = #tpu.pipeline_mode<synchronous>, transform_indices = @transform_5, window_bounds = array<i64: 128, 128>}, {pipeline_mode = #tpu.pipeline_mode<synchronous>, transform_indices = @transform_6, window_bounds = array<i64: 1, 128>}, {transform_indices = @transform_7, window_bounds = array<i64: 1, 128, 128>}]} {
    %c128_i32 = arith.constant 128 : i32
    %0 = arith.muli %arg2, %c128_i32 : i32
    %1 = tpu.assume_multiple %0, 128 : i32
    %c0 = arith.constant 0 : index
    %2 = arith.index_cast %1 : i32 to index
    %c0_0 = arith.constant 0 : index
    %3 = vector.load %arg5[%c0, %2, %c0_0] : memref<1x128x1xf32, #tpu.memory_space<vmem>>, vector<1x128x1xf32>
    %4 = vector.shape_cast %3 : vector<1x128x1xf32> to vector<128x1xf32>
    %c0_1 = arith.constant 0 : index
    %c0_2 = arith.constant 0 : index
    %c0_3 = arith.constant 0 : index
    %5 = vector.load %arg4[%c0_1, %c0_2, %c0_3] : memref<1x128x128xbf16, #tpu.memory_space<vmem>>, vector<1x128x128xbf16>
    %6 = vector.shape_cast %5 : vector<1x128x128xbf16> to vector<128x128xbf16>
    %c0_i32 = arith.constant 0 : i32
    %7 = arith.cmpi eq, %arg1, %c0_i32 : i32
    %c0_i32_4 = arith.constant 0 : i32
    %8 = arith.cmpi eq, %arg2, %c0_i32_4 : i32
    %9 = arith.andi %7, %8 : i1
    %10 = arith.extui %9 : i1 to i32
    %c0_i32_5 = arith.constant 0 : i32
    %11 = arith.cmpi ne, %10, %c0_i32_5 : i32
    scf.if %11 {
      %c0_9 = arith.constant 0 : index
      %c0_10 = arith.constant 0 : index
      %c0_11 = arith.constant 0 : index
      %18 = vector.load %arg3[%c0_9, %c0_10, %c0_11] : memref<1x128x128xbf16, #tpu.memory_space<vmem>>, vector<1x128x128xbf16>
      %19 = vector.shape_cast %18 : vector<1x128x128xbf16> to vector<128x128xbf16>
      %c0_12 = arith.constant 0 : index
      %c0_13 = arith.constant 0 : index
      %20 = vector.load %arg6[%c0_12, %c0_13] : memref<128x128xbf16, #tpu.memory_space<vmem>>, vector<128x128xbf16>
      %cst = arith.constant dense<0.000000e+00> : vector<128x128xf32>
      %21 = tpu.matmul %19, %20, %cst {dimension_numbers = #tpu.dot_dimension_numbers<[1], [0], [0], [1], [0, 0, 1, 1], [], []>} : vector<128x128xbf16>, vector<128x128xbf16>, vector<128x128xf32> -> vector<128x128xf32>
      %c0_14 = arith.constant 0 : index
      %c0_15 = arith.constant 0 : index
      %c0_16 = arith.constant 0 : index
      %22 = vector.load %arg5[%c0_14, %c0_15, %c0_16] : memref<1x128x1xf32, #tpu.memory_space<vmem>>, vector<1x128x1xf32>
      %23 = vector.shape_cast %22 : vector<1x128x1xf32> to vector<128x1xf32>
      %24 = vector.broadcast %23 : vector<128x1xf32> to vector<128x128xf32>
      %25 = arith.mulf %24, %21 : vector<128x128xf32>
      %26 = arith.truncf %25 : vector<128x128xf32> to vector<128x128xbf16>
      %c0_17 = arith.constant 0 : index
      %c0_18 = arith.constant 0 : index
      %27 = vector.load %arg11[%c0_17, %c0_18] : memref<128x128xbf16, #tpu.memory_space<vmem>>, vector<128x128xbf16>
      tpu.vector_store %arg11[%c0_17, %c0_18], %26 {strides = array<i32>} : memref<128x128xbf16, #tpu.memory_space<vmem>>, vector<128x128xbf16>,
    } else {
    }
    %c0_i32_6 = arith.constant 0 : i32
    %12 = arith.cmpi eq, %arg1, %c0_i32_6 : i32
    %13 = arith.extui %12 : i1 to i32
    %c0_i32_7 = arith.constant 0 : i32
    %14 = arith.cmpi ne, %13, %c0_i32_7 : i32
    scf.if %14 {
      %c0_9 = arith.constant 0 : index
      %c0_10 = arith.constant 0 : index
      %18 = vector.load %arg11[%c0_9, %c0_10] : memref<128x128xbf16, #tpu.memory_space<vmem>>, vector<128x128xbf16>
      %cst = arith.constant dense<0.000000e+00> : vector<128x128xf32>
      %19 = tpu.matmul %6, %18, %cst {dimension_numbers = #tpu.dot_dimension_numbers<[1], [0], [0], [1], [0, 0, 1, 1], [], []>} : vector<128x128xbf16>, vector<128x128xbf16>, vector<128x128xf32> -> vector<128x128xf32>
      %20 = vector.broadcast %4 : vector<128x1xf32> to vector<128x128xf32>
      %21 = arith.mulf %20, %19 : vector<128x128xf32>
      %c0_11 = arith.constant 0 : index
      %c0_12 = arith.constant 0 : index
      %22 = vector.load %arg7[%c0_11, %c0_12] : memref<1x128xf32, #tpu.memory_space<vmem>>, vector<1x128xf32>
      %23 = vector.broadcast %22 : vector<1x128xf32> to vector<128x128xf32>
      %24 = arith.addf %21, %23 : vector<128x128xf32>
      %cst_13 = arith.constant 0.000000e+00 : f32
      %25 = vector.broadcast %cst_13 : f32 to vector<128x128xf32>
      %26 = arith.maximumf %24, %25 : vector<128x128xf32>
      %27 = arith.truncf %26 : vector<128x128xf32> to vector<128x128xbf16>
      %c0_14 = arith.constant 0 : index
      %c0_15 = arith.constant 0 : index
      %28 = vector.load %arg8[%c0_14, %c0_15] : memref<128x128xbf16, #tpu.memory_space<vmem>>, vector<128x128xbf16>
      %cst_16 = arith.constant dense<0.000000e+00> : vector<128x128xf32>
      %29 = tpu.matmul %27, %28, %cst_16 {dimension_numbers = #tpu.dot_dimension_numbers<[1], [0], [0], [1], [0, 0, 1, 1], [], []>} : vector<128x128xbf16>, vector<128x128xbf16>, vector<128x128xf32> -> vector<128x128xf32>
      %30 = vector.broadcast %4 : vector<128x1xf32> to vector<128x128xf32>
      %31 = arith.mulf %30, %29 : vector<128x128xf32>
      %32 = arith.truncf %31 : vector<128x128xf32> to vector<128x128xbf16>
      %33 = arith.index_cast %1 : i32 to index
      %c0_17 = arith.constant 0 : index
      %34 = vector.load %arg12[%33, %c0_17] : memref<128x128xbf16, #tpu.memory_space<vmem>>, vector<128x128xbf16>
      tpu.vector_store %arg12[%33, %c0_17], %32 {strides = array<i32>} : memref<128x128xbf16, #tpu.memory_space<vmem>>, vector<128x128xbf16>,
    } else {
    }
    %c1_i32 = arith.constant 1 : i32
    %15 = arith.cmpi eq, %arg1, %c1_i32 : i32
    %16 = arith.extui %15 : i1 to i32
    %c0_i32_8 = arith.constant 0 : i32
    %17 = arith.cmpi ne, %16, %c0_i32_8 : i32
    scf.if %17 {
      %c0_9 = arith.constant 0 : index
      %c0_10 = arith.constant 0 : index
      %18 = vector.load %arg12[%c0_9, %c0_10] : memref<128x128xbf16, #tpu.memory_space<vmem>>, vector<128x128xbf16>
      %cst = arith.constant dense<0.000000e+00> : vector<128x128xf32>
      %19 = tpu.matmul %6, %18, %cst {dimension_numbers = #tpu.dot_dimension_numbers<[1], [0], [0], [1], [0, 0, 1, 1], [], []>} : vector<128x128xbf16>, vector<128x128xbf16>, vector<128x128xf32> -> vector<128x128xf32>
      %20 = vector.broadcast %4 : vector<128x1xf32> to vector<128x128xf32>
      %21 = arith.mulf %20, %19 : vector<128x128xf32>
      %c0_11 = arith.constant 0 : index
      %c0_12 = arith.constant 0 : index
      %22 = vector.load %arg9[%c0_11, %c0_12] : memref<1x128xf32, #tpu.memory_space<vmem>>, vector<1x128xf32>
      %23 = vector.broadcast %22 : vector<1x128xf32> to vector<128x128xf32>
      %24 = arith.addf %21, %23 : vector<128x128xf32>
      %cst_13 = arith.constant 0.000000e+00 : f32
      %25 = vector.broadcast %cst_13 : f32 to vector<128x128xf32>
      %26 = arith.maximumf %24, %25 : vector<128x128xf32>
      %c0_14 = arith.constant 0 : index
      %c0_15 = arith.constant 0 : index
      %c0_16 = arith.constant 0 : index
      %27 = vector.load %arg10[%c0_14, %c0_15, %c0_16] : memref<1x128x128xf32, #tpu.memory_space<vmem>>, vector<1x128x128xf32>
      %28 = vector.shape_cast %27 : vector<1x128x128xf32> to vector<128x128xf32>
      %29 = vector.shape_cast %26 : vector<128x128xf32> to vector<1x128x128xf32>
      tpu.vector_store %arg10[%c0_14, %c0_15, %c0_16], %29 {strides = array<i32>} : memref<1x128x128xf32, #tpu.memory_space<vmem>>, vector<1x128x128xf32>,
    } else {
    }
    return
  }
  func.func @transform_0(%arg0: i32, %arg1: i32, %arg2: i32) -> (i32, i32, i32) {
    %c0_i32 = arith.constant 0 : i32
    %c0_i32_0 = arith.constant 0 : i32
    %c0_i32_1 = arith.constant 0 : i32
    return %arg0, %c0_i32, %c0_i32_0 : i32, i32, i32
  }
  func.func @transform_1(%arg0: i32, %arg1: i32, %arg2: i32) -> (i32, i32, i32) {
    %c0_i32 = arith.constant 0 : i32
    %c0_i32_0 = arith.constant 0 : i32
    return %arg0, %arg2, %c0_i32 : i32, i32, i32
  }
  func.func @transform_2(%arg0: i32, %arg1: i32, %arg2: i32) -> (i32, i32, i32) {
    %c0_i32 = arith.constant 0 : i32
    %c0_i32_0 = arith.constant 0 : i32
    %c0_i32_1 = arith.constant 0 : i32
    return %arg0, %c0_i32, %c0_i32_0 : i32, i32, i32
  }
  func.func @transform_3(%arg0: i32, %arg1: i32, %arg2: i32) -> (i32, i32) {
    %c0_i32 = arith.constant 0 : i32
    %c0_i32_0 = arith.constant 0 : i32
    %c0_i32_1 = arith.constant 0 : i32
    return %c0_i32, %c0_i32_0 : i32, i32
  }
  func.func @transform_4(%arg0: i32, %arg1: i32, %arg2: i32) -> (i32, i32) {
    %c0_i32 = arith.constant 0 : i32
    %c0_i32_0 = arith.constant 0 : i32
    %c0_i32_1 = arith.constant 0 : i32
    return %c0_i32, %c0_i32_0 : i32, i32
  }
  func.func @transform_5(%arg0: i32, %arg1: i32, %arg2: i32) -> (i32, i32) {
    %c0_i32 = arith.constant 0 : i32
    %c0_i32_0 = arith.constant 0 : i32
    %c0_i32_1 = arith.constant 0 : i32
    return %c0_i32, %c0_i32_0 : i32, i32
  }
  func.func @transform_6(%arg0: i32, %arg1: i32, %arg2: i32) -> (i32, i32) {
    %c0_i32 = arith.constant 0 : i32
    %c0_i32_0 = arith.constant 0 : i32
    %c0_i32_1 = arith.constant 0 : i32
    return %c0_i32, %c0_i32_0 : i32, i32
  }
  func.func @transform_7(%arg0: i32, %arg1: i32, %arg2: i32) -> (i32, i32, i32) {
    %0 = arith.muli %arg2, %arg1 : i32
    %c0_i32 = arith.constant 0 : i32
    %c0_i32_0 = arith.constant 0 : i32
    return %arg0, %0, %c0_i32 : i32, i32, i32
  }
}

</mosaic_0001>

<llo_original>
// kernel: tpu_custom_call.1
$region0: #{tpu_custom_call.1}
  #allocation0 [shape = 'u32[]', space=smem, size = 0x4, offset = 0x4, fixed_abs, tag = 'smem constant byte address 0x4 - core index']
  #allocation1 [shape = 'u32[144,128]{1,0:T(1,128)}', space=vmem, size = 0x12000, scoped, tag = 'internal scratch']
  #allocation2 [shape = 'bf16[128,128]{1,0:T(8,128)(2,1)}', space=vmem, size = 0x8000, scoped, tag = 'scratch operand']
  #allocation3 [shape = 'bf16[128,128]{1,0:T(8,128)(2,1)}', space=vmem, size = 0x8000, scoped, tag = 'scratch operand']
  %s0 = inlined_call_operand.vmem [shape: bf16[3,128,128], index: 0, kind: input, shape index: {}]
  %s1 = inlined_call_operand.vmem [shape: bf16[3,128,128], index: 1, kind: input, shape index: {}]
  %s2 = inlined_call_operand.vmem [shape: f32[3,128,1], index: 2, kind: input, shape index: {}]
  %s3 = inlined_call_operand.hbm [shape: bf16[128,128], index: 3, kind: input, shape index: {}]
  %s4 = inlined_call_operand.vmem [shape: f32[1,128], index: 4, kind: input, shape index: {}]
  %s5 = inlined_call_operand.hbm [shape: bf16[128,128], index: 5, kind: input, shape index: {}]
  %s6 = inlined_call_operand.vmem [shape: f32[1,128], index: 6, kind: input, shape index: {}]
  %s7 = inlined_call_operand.hbm [shape: f32[3,128,128], index: 7, kind: output, shape index: {}]
  %s8 = sld [smem:[#allocation0]]
  $region81: #{tpu_custom_call.1} parent=0
    _
  %s10 = ssub.s32 1, %s8
  %s11 = scalar_select 0, %s10, %s8
  $region1: #{tpu_custom_call.1} parent=0
    #allocation4 [shape = 'u8[32768]{0}', space=vmem, size = 0x8000, scoped, tag = 'input window, operand 3, single buffered']
    #allocation5 [shape = 's32[2]{0}', space=sflag, size = 0x8, scoped, tag = 'scoped memory for tpu_custom_call.1']
    #allocation6 [shape = 's32[2]{0}', space=sflag, size = 0x8, scoped, tag = 'scoped memory for tpu_custom_call.1']
    #allocation7 [shape = 'u8[32768]{0}', space=vmem, size = 0x8000, scoped, tag = 'input window, operand 5, single buffered']
    #allocation8 [shape = 's32[1]{0}', space=sflag, size = 0x4, scoped, tag = 'scoped memory for tpu_custom_call.1']
    #allocation9 [shape = 'u8[131072]{0}', space=vmem, size = 0x20000, scoped, tag = 'output window, operand 0']
    %12 = vsyncpa [#allocation5], 0
    %13 = vsyncpa [#allocation8], 0
    %14 = vsyncpa [#allocation6], 0
    %s15 = scalar_lea.sflag [#allocation6], 1
    %16 = vsyncpa %s15, 0
    loop: start=0, step=1, limit=8
    $region2: #{tpu_custom_call.1} parent=1 // loop_pre_header
      _
    $region3: #{tpu_custom_call.1} parent=1 // loop_header
      %s18 = sphi 0, %s22
      %p19 = scmp.ge.s32.totalorder %s18, 8
      %s25 = sphi 0, %s44
      %s26 = sphi 0, %s40
      %s27 = sphi 0, %s36
      %s28 = sphi 0, %s25
      %s29 = sphi 0, %s26
      %s30 = sphi 0, %s27
      %s31 = sphi 0, %s28
      %s32 = sphi 0, %s29
      %s33 = sphi 0, %s30
      %s47 = sphi 0, %s49
      %s50 = sphi 0, %s47
      %s51 = sphi 0, %s50
      %s67 = sphi 0, %s51
      %s75 = sphi 0, %s77
      %s78 = sphi 0, %s75
      %s79 = sphi 0, %s78
      %s95 = sphi 0, %s79
      %s101 = sphi 0, %s103
      %s104 = sphi 0, %s101
      %s105 = sphi 0, %s104
      %s121 = sphi 0, %s105
      %s125 = sphi 0, %s125
      %s127 = sphi 0, %s125
      %s128 = sphi 0, %s127
      %s142 = sphi 0, %s128
      %s146 = sphi 0, %s146
      %s148 = sphi 0, %s146
      %s149 = sphi 0, %s148
      %s163 = sphi 0, %s149
      %s167 = sphi 0, %s167
      %s169 = sphi 0, %s167
      %s170 = sphi 0, %s169
      %s184 = sphi 0, %s170
      %s188 = sphi 0, %s188
      %s190 = sphi 0, %s188
      %s191 = sphi 0, %s190
      %s205 = sphi 0, %s191
      %s215 = sphi 0, %s217
      %s218 = sphi 0, %s215
      %s219 = sphi 0, %s218
      %s235 = sphi 0, %s219
    $region4: #{tpu_custom_call.1} parent=1 // loop_header_branch
      %21 = sbr.rel (%p19) target = $region8
    $region5: #{tpu_custom_call.1} parent=1 // loop_body
      %s23 = ssub.s32 %s18, 1
      %s24 = ssub.s32 %s18, 2
      %s34 = sadd.s32 1, %s27
      %p35 = scmp.ge.s32.totalorder %s34, 1
      %s36 = scalar_select %p35, 0, %s34
      %s37 = sadd.s32 1, %s26
      %s38 = scalar_select %p35, %s37, %s26
      %p39 = scmp.ge.s32.totalorder %s38, 2
      %s40 = scalar_select %p39, 0, %s38
      %s41 = sadd.s32 1, %s25
      %s42 = scalar_select %p39, %s41, %s25
      %p43 = scmp.ge.s32.totalorder %s42, 3
      %s44 = scalar_select %p43, 0, %s42
      %s45 = ssub.s32 %s25, %s44
      %p46 = scmp.eq.s32.totalorder %s45, 0
      %s48 = sadd.s32 %s47, 1
      %s49 = scalar_select %p46, %s47, %s48
      %p52 = pneg %p46
      %p53 = scmp.eq.s32.totalorder %s18, 5
      %p54 = por %p52, %p53
      %p55 = scmp.ne.s32.totalorder %s47, %s50
      %p56 = scmp.eq.s32.totalorder %s18, 0
      %p57 = por %p55, %p56
      %p58 = scmp.ne.s32.totalorder %s47, %s50
      %p59 = scmp.eq.s32.totalorder %s23, 5
      %p60 = por %p58, %p59
      %p61 = scmp.ne.s32.totalorder %s50, %s51
      %p62 = scmp.eq.s32.totalorder %s23, 0
      %p63 = por %p61, %p62
      %p64 = scmp.ne.s32.totalorder %s50, %s51
      %p65 = scmp.eq.s32.totalorder %s24, 5
      %p66 = por %p64, %p65
      %p68 = scmp.ne.s32.totalorder %s51, %s67
      %p69 = scmp.eq.s32.totalorder %s24, 0
      %p70 = por %p68, %p69
      %s71 = ssub.s32 %s25, %s44
      %s72 = ssub.s32 %s27, %s36
      %s73 = sor.u32 %s71, %s72
      %p74 = scmp.eq.s32.totalorder %s73, 0
      %s76 = sadd.s32 %s75, 1
      %s77 = scalar_select %p74, %s75, %s76
      %p80 = pneg %p74
      %p81 = scmp.eq.s32.totalorder %s18, 5
      %p82 = por %p80, %p81
      %p83 = scmp.ne.s32.totalorder %s75, %s78
      %p84 = scmp.eq.s32.totalorder %s18, 0
      %p85 = por %p83, %p84
      %p86 = scmp.ne.s32.totalorder %s75, %s78
      %p87 = scmp.eq.s32.totalorder %s23, 5
      %p88 = por %p86, %p87
      %p89 = scmp.ne.s32.totalorder %s78, %s79
      %p90 = scmp.eq.s32.totalorder %s23, 0
      %p91 = por %p89, %p90
      %p92 = scmp.ne.s32.totalorder %s78, %s79
      %p93 = scmp.eq.s32.totalorder %s24, 5
      %p94 = por %p92, %p93
      %p96 = scmp.ne.s32.totalorder %s79, %s95
      %p97 = scmp.eq.s32.totalorder %s24, 0
      %p98 = por %p96, %p97
      %s99 = ssub.s32 %s25, %s44
      %p100 = scmp.eq.s32.totalorder %s99, 0
      %s102 = sadd.s32 %s101, 1
      %s103 = scalar_select %p100, %s101, %s102
      %p106 = pneg %p100
      %p107 = scmp.eq.s32.totalorder %s18, 5
      %p108 = por %p106, %p107
      %p109 = scmp.ne.s32.totalorder %s101, %s104
      %p110 = scmp.eq.s32.totalorder %s18, 0
      %p111 = por %p109, %p110
      %p112 = scmp.ne.s32.totalorder %s101, %s104
      %p113 = scmp.eq.s32.totalorder %s23, 5
      %p114 = por %p112, %p113
      %p115 = scmp.ne.s32.totalorder %s104, %s105
      %p116 = scmp.eq.s32.totalorder %s23, 0
      %p117 = por %p115, %p116
      %p118 = scmp.ne.s32.totalorder %s104, %s105
      %p119 = scmp.eq.s32.totalorder %s24, 5
      %p120 = por %p118, %p119
      %p122 = scmp.ne.s32.totalorder %s105, %s121
      %p123 = scmp.eq.s32.totalorder %s24, 0
      %p124 = por %p122, %p123
      %s126 = sadd.s32 %s125, 1
      %p129 = scmp.eq.s32.totalorder %s18, 5
      %p130 = scmp.ne.s32.totalorder %s125, %s127
      %p131 = scmp.eq.s32.totalorder %s18, 0
      %p132 = por %p130, %p131
      %p133 = scmp.ne.s32.totalorder %s125, %s127
      %p134 = scmp.eq.s32.totalorder %s23, 5
      %p135 = por %p133, %p134
      %p136 = scmp.ne.s32.totalorder %s127, %s128
      %p137 = scmp.eq.s32.totalorder %s23, 0
      %p138 = por %p136, %p137
      %p139 = scmp.ne.s32.totalorder %s127, %s128
      %p140 = scmp.eq.s32.totalorder %s24, 5
      %p141 = por %p139, %p140
      %p143 = scmp.ne.s32.totalorder %s128, %s142
      %p144 = scmp.eq.s32.totalorder %s24, 0
      %p145 = por %p143, %p144
      %s147 = sadd.s32 %s146, 1
      %p150 = scmp.eq.s32.totalorder %s18, 5
      %p151 = scmp.ne.s32.totalorder %s146, %s148
      %p152 = scmp.eq.s32.totalorder %s18, 0
      %p153 = por %p151, %p152
      %p154 = scmp.ne.s32.totalorder %s146, %s148
      %p155 = scmp.eq.s32.totalorder %s23, 5
      %p156 = por %p154, %p155
      %p157 = scmp.ne.s32.totalorder %s148, %s149
      %p158 = scmp.eq.s32.totalorder %s23, 0
      %p159 = por %p157, %p158
      %p160 = scmp.ne.s32.totalorder %s148, %s149
      %p161 = scmp.eq.s32.totalorder %s24, 5
      %p162 = por %p160, %p161
      %p164 = scmp.ne.s32.totalorder %s149, %s163
      %p165 = scmp.eq.s32.totalorder %s24, 0
      %p166 = por %p164, %p165
      %s168 = sadd.s32 %s167, 1
      %p171 = scmp.eq.s32.totalorder %s18, 5
      %p172 = scmp.ne.s32.totalorder %s167, %s169
      %p173 = scmp.eq.s32.totalorder %s18, 0
      %p174 = por %p172, %p173
      %p175 = scmp.ne.s32.totalorder %s167, %s169
      %p176 = scmp.eq.s32.totalorder %s23, 5
      %p177 = por %p175, %p176
      %p178 = scmp.ne.s32.totalorder %s169, %s170
      %p179 = scmp.eq.s32.totalorder %s23, 0
      %p180 = por %p178, %p179
      %p181 = scmp.ne.s32.totalorder %s169, %s170
      %p182 = scmp.eq.s32.totalorder %s24, 5
      %p183 = por %p181, %p182
      %p185 = scmp.ne.s32.totalorder %s170, %s184
      %p186 = scmp.eq.s32.totalorder %s24, 0
      %p187 = por %p185, %p186
      %s189 = sadd.s32 %s188, 1
      %p192 = scmp.eq.s32.totalorder %s18, 5
      %p193 = scmp.ne.s32.totalorder %s188, %s190
      %p194 = scmp.eq.s32.totalorder %s18, 0
      %p195 = por %p193, %p194
      %p196 = scmp.ne.s32.totalorder %s188, %s190
      %p197 = scmp.eq.s32.totalorder %s23, 5
      %p198 = por %p196, %p197
      %p199 = scmp.ne.s32.totalorder %s190, %s191
      %p200 = scmp.eq.s32.totalorder %s23, 0
      %p201 = por %p199, %p200
      %p202 = scmp.ne.s32.totalorder %s190, %s191
      %p203 = scmp.eq.s32.totalorder %s24, 5
      %p204 = por %p202, %p203
      %p206 = scmp.ne.s32.totalorder %s191, %s205
      %p207 = scmp.eq.s32.totalorder %s24, 0
      %p208 = por %p206, %p207
      %s209 = smul.u32 %s27, %s26
      %s210 = smul.u32 %s36, %s40
      %s211 = ssub.s32 %s25, %s44
      %s212 = ssub.s32 %s209, %s210
      %s213 = sor.u32 %s211, %s212
      %p214 = scmp.eq.s32.totalorder %s213, 0
      %s216 = sadd.s32 %s215, 1
      %s217 = scalar_select %p214, %s215, %s216
      %p220 = pneg %p214
      %p221 = scmp.eq.s32.totalorder %s18, 5
      %p222 = por %p220, %p221
      %p223 = scmp.ne.s32.totalorder %s215, %s218
      %p224 = scmp.eq.s32.totalorder %s18, 0
      %p225 = por %p223, %p224
      %p226 = scmp.ne.s32.totalorder %s215, %s218
      %p227 = scmp.eq.s32.totalorder %s23, 5
      %p228 = por %p226, %p227
      %p229 = scmp.ne.s32.totalorder %s218, %s219
      %p230 = scmp.eq.s32.totalorder %s23, 0
      %p231 = por %p229, %p230
      %p232 = scmp.ne.s32.totalorder %s218, %s219
      %p233 = scmp.eq.s32.totalorder %s24, 5
      %p234 = por %p232, %p233
      %p236 = scmp.ne.s32.totalorder %s219, %s235
      %p237 = scmp.eq.s32.totalorder %s24, 0
      %p238 = por %p236, %p237
      %p239 = scmp.le.s32.totalorder 1, %s18
      %p240 = scmp.lt.s32.totalorder %s18, 7
      %p241 = pnand %p239, %p240
      %p242 = pneg %p241
      // Predicated region
      $region9: #{tpu_custom_call.1} parent=5 // pred_check
        _
      $region10: #{tpu_custom_call.1} parent=5 // pred_check_branch
        %244 = sbr.rel (%p241) target = $region12
      $region11: #{tpu_custom_call.1} parent=5 // pred_region
        %s245 = ssub.s32 %s18, 1
        // Predicated region
        $region13: #{tpu_custom_call.1} parent=11 // pred_check
          %p246 = pneg %p138
        $region14: #{tpu_custom_call.1} parent=11 // pred_check_branch
          %248 = sbr.rel (%p246) target = $region16
        $region15: #{tpu_custom_call.1} parent=11 // pred_region
          %s250 = ssub.s32 1024, 1024
          %251 = vsyncadd [#allocation5], %s250
          %s252 = sshll.u32 [#allocation4], 4
          %s253 = int_to_ptr.vmem [resolvable:$true] %s252
          %258 = dma.hbm_to_vmem [thread:$0]  %s3, 1024, %s253, [#allocation5], 64, 64, 4
        $region16: #{tpu_custom_call.1} parent=11 // pred_fallthru
          _
        // Predicated region
        $region17: #{tpu_custom_call.1} parent=11 // pred_check
          %p259 = pneg %p159
        $region18: #{tpu_custom_call.1} parent=11 // pred_check_branch
          %261 = sbr.rel (%p259) target = $region20
        $region19: #{tpu_custom_call.1} parent=11 // pred_region
          _
        $region20: #{tpu_custom_call.1} parent=11 // pred_fallthru
          _
        // Predicated region
        $region21: #{tpu_custom_call.1} parent=11 // pred_check
          %p262 = pneg %p180
        $region22: #{tpu_custom_call.1} parent=11 // pred_check_branch
          %264 = sbr.rel (%p262) target = $region24
        $region23: #{tpu_custom_call.1} parent=11 // pred_region
          %s266 = ssub.s32 1024, 1024
          %267 = vsyncadd [#allocation8], %s266
          %s268 = sshll.u32 [#allocation7], 4
          %s269 = int_to_ptr.vmem [resolvable:$true] %s268
          %274 = dma.hbm_to_vmem [thread:$0]  %s5, 1024, %s269, [#allocation8], 64, 64, 4
        $region24: #{tpu_custom_call.1} parent=11 // pred_fallthru
          _
        // Predicated region
        $region25: #{tpu_custom_call.1} parent=11 // pred_check
          %p275 = pneg %p201
        $region26: #{tpu_custom_call.1} parent=11 // pred_check_branch
          %277 = sbr.rel (%p275) target = $region28
        $region27: #{tpu_custom_call.1} parent=11 // pred_region
          _
        $region28: #{tpu_custom_call.1} parent=11 // pred_fallthru
          _
      $region12: #{tpu_custom_call.1} parent=5 // pred_fallthru
        _
      %p278 = scmp.lt.s32.totalorder %s18, 6
      // Predicated region
      $region29: #{tpu_custom_call.1} parent=5 // pred_check
        %p279 = pneg %p278
      $region30: #{tpu_custom_call.1} parent=5 // pred_check_branch
        %281 = sbr.rel (%p279) target = $region32
      $region31: #{tpu_custom_call.1} parent=5 // pred_region
        // Predicated region
        $region33: #{tpu_custom_call.1} parent=31 // pred_check
          %p282 = pneg %p57
        $region34: #{tpu_custom_call.1} parent=31 // pred_check_branch
          %284 = sbr.rel (%p282) target = $region36
        $region35: #{tpu_custom_call.1} parent=31 // pred_region
          %p285 = scmp.lt.s32.totalorder %s25, 2
          %s286 = scalar_select %p285, %s25, 2
          %s287 = smul.addr %s286, 16
          %s288 = smul.addr %s287, 4
          %s289 = scalar_lea.vmem %s0, %s288
        $region36: #{tpu_custom_call.1} parent=31 // pred_fallthru
          _
        // Predicated region
        $region37: #{tpu_custom_call.1} parent=31 // pred_check
          %p290 = pneg %p85
        $region38: #{tpu_custom_call.1} parent=31 // pred_check_branch
          %292 = sbr.rel (%p290) target = $region40
        $region39: #{tpu_custom_call.1} parent=31 // pred_region
          %s293 = smul.u32 16, %s27
          %p294 = scmp.lt.s32.totalorder %s25, 2
          %s295 = scalar_select %p294, %s25, 2
          %p296 = scmp.lt.s32.totalorder %s293, 15
          %s297 = scalar_select %p296, %s293, 15
          %s298 = smul.addr %s295, 16
          %s299 = sadd.s32 %s297, %s298
          %s300 = smul.addr %s299, 4
          %s301 = scalar_lea.vmem %s1, %s300
          %s302 = smul.u32 16, %s27
        $region40: #{tpu_custom_call.1} parent=31 // pred_fallthru
          _
        // Predicated region
        $region41: #{tpu_custom_call.1} parent=31 // pred_check
          %p303 = pneg %p111
        $region42: #{tpu_custom_call.1} parent=31 // pred_check_branch
          %305 = sbr.rel (%p303) target = $region44
        $region43: #{tpu_custom_call.1} parent=31 // pred_region
          %p306 = scmp.lt.s32.totalorder %s25, 2
          %s307 = scalar_select %p306, %s25, 2
          %s308 = smul.addr %s307, 16
          %s309 = smul.addr %s308, 8
          %s310 = scalar_lea.vmem %s2, %s309
        $region44: #{tpu_custom_call.1} parent=31 // pred_fallthru
          _
      $region32: #{tpu_custom_call.1} parent=5 // pred_fallthru
        _
      %p311 = scmp.le.s32.totalorder 1, %s18
      %p312 = scmp.lt.s32.totalorder %s18, 7
      %p313 = pnand %p311, %p312
      %p314 = pneg %p313
      // Predicated region
      $region45: #{tpu_custom_call.1} parent=5 // pred_check
        _
      $region46: #{tpu_custom_call.1} parent=5 // pred_check_branch
        %316 = sbr.rel (%p313) target = $region48
      $region47: #{tpu_custom_call.1} parent=5 // pred_region
        %s317 = ssub.s32 %s18, 1
        // Predicated region
        $region49: #{tpu_custom_call.1} parent=47 // pred_check
          %p318 = pneg %p138
        $region50: #{tpu_custom_call.1} parent=47 // pred_check_branch
          %320 = sbr.rel (%p318) target = $region52
        $region51: #{tpu_custom_call.1} parent=47 // pred_region
          %321 = dma.done [#allocation5], 1024
        $region52: #{tpu_custom_call.1} parent=47 // pred_fallthru
          _
        // Predicated region
        $region53: #{tpu_custom_call.1} parent=47 // pred_check
          %p322 = pneg %p180
        $region54: #{tpu_custom_call.1} parent=47 // pred_check_branch
          %324 = sbr.rel (%p322) target = $region56
        $region55: #{tpu_custom_call.1} parent=47 // pred_region
          %325 = dma.done [#allocation8], 1024
        $region56: #{tpu_custom_call.1} parent=47 // pred_fallthru
          _
        %p326 = scmp.lt.s32.totalorder %s28, 2
        %s327 = scalar_select %p326, %s28, 2
        %s328 = smul.addr %s327, 16
        %s329 = smul.addr %s328, 4
        %s330 = scalar_lea.vmem %s0, %s329
        %p331 = pneg %p63
        %p332 = pneg %p60
        %s333 = smul.u32 16, %s30
        %p334 = scmp.lt.s32.totalorder %s28, 2
        %s335 = scalar_select %p334, %s28, 2
        %p336 = scmp.lt.s32.totalorder %s333, 15
        %s337 = scalar_select %p336, %s333, 15
        %s338 = smul.addr %s335, 16
        %s339 = sadd.s32 %s337, %s338
        %s340 = smul.addr %s339, 4
        %s341 = scalar_lea.vmem %s1, %s340
        %p342 = pneg %p91
        %p343 = pneg %p88
        %p344 = scmp.lt.s32.totalorder %s28, 2
        %s345 = scalar_select %p344, %s28, 2
        %s346 = smul.addr %s345, 16
        %s347 = smul.addr %s346, 8
        %s348 = scalar_lea.vmem %s2, %s347
        %p349 = pneg %p117
        %p350 = pneg %p114
        %p351 = pneg %p138
        %p352 = pneg %p135
        %p353 = pneg %p159
        %p354 = pneg %p156
        %p355 = pneg %p180
        %p356 = pneg %p177
        %p357 = pneg %p201
        %p358 = pneg %p198
        %p359 = pneg %p231
        %p360 = pneg %p228
        %s361 = sand.u32 %s218, 1
        %s362 = scalar_lea.sflag [#allocation6], %s361
        %s363 = sand.u32 %s218, 1
        %s364 = smul.addr %s363, 128
        %s365 = scalar_lea.vmem [#allocation9], %s364
        %p366 = scmp.lt.s32.totalorder %s28, 2
        %s367 = scalar_select %p366, %s28, 2
        %s368 = smul.addr %s367, 16
        %s369 = smul.addr %s368, 4
        %s370 = scalar_lea.vmem %s0, %s369
        %s371 = smul.u32 16, %s30
        %p372 = scmp.lt.s32.totalorder %s28, 2
        %s373 = scalar_select %p372, %s28, 2
        %p374 = scmp.lt.s32.totalorder %s371, 15
        %s375 = scalar_select %p374, %s371, 15
        %s376 = smul.addr %s373, 16
        %s377 = sadd.s32 %s375, %s376
        %s378 = smul.addr %s377, 4
        %s379 = scalar_lea.vmem %s1, %s378
        %s380 = smul.u32 16, %s30
        %p381 = scmp.lt.s32.totalorder %s28, 2
        %s382 = scalar_select %p381, %s28, 2
        %s383 = smul.addr %s382, 16
        %s384 = smul.addr %s383, 8
        %s385 = scalar_lea.vmem %s2, %s384
        %s386 = smul.u32 %s30, %s29
        %s387 = smul.u32 16, %s386
        %s389 = smul.u32 %s30, 128
        %s390 = scalar_lea.vmem %s385, %s389
        %v391 = vld [vmem:[%s390] sm:$0xff]
        %v392 = vld [vmem:[%s390 + $0x8] sm:$0xff]
        %v393 = vld [vmem:[%s390 + $0x10] sm:$0xff]
        %v394 = vld [vmem:[%s390 + $0x18] sm:$0xff]
        %v395 = vld [vmem:[%s390 + $0x20] sm:$0xff]
        %v396 = vld [vmem:[%s390 + $0x28] sm:$0xff]
        %v397 = vld [vmem:[%s390 + $0x30] sm:$0xff]
        %v398 = vld [vmem:[%s390 + $0x38] sm:$0xff]
        %v399 = vld [vmem:[%s390 + $0x40] sm:$0xff]
        %v400 = vld [vmem:[%s390 + $0x48] sm:$0xff]
        %v401 = vld [vmem:[%s390 + $0x50] sm:$0xff]
        %v402 = vld [vmem:[%s390 + $0x58] sm:$0xff]
        %v403 = vld [vmem:[%s390 + $0x60] sm:$0xff]
        %v404 = vld [vmem:[%s390 + $0x68] sm:$0xff]
        %v405 = vld [vmem:[%s390 + $0x70] sm:$0xff]
        %v406 = vld [vmem:[%s390 + $0x78] sm:$0xff]
        %v407 = vld [vmem:[%s379] sm:$0xf]
        %v408 = vld [vmem:[%s379 + $0x4] sm:$0xf]
        %v409 = vld [vmem:[%s379 + $0x8] sm:$0xf]
        %v410 = vld [vmem:[%s379 + $0xc] sm:$0xf]
        %v411 = vld [vmem:[%s379 + $0x10] sm:$0xf]
        %v412 = vld [vmem:[%s379 + $0x14] sm:$0xf]
        %v413 = vld [vmem:[%s379 + $0x18] sm:$0xf]
        %v414 = vld [vmem:[%s379 + $0x1c] sm:$0xf]
        %v415 = vld [vmem:[%s379 + $0x20] sm:$0xf]
        %v416 = vld [vmem:[%s379 + $0x24] sm:$0xf]
        %v417 = vld [vmem:[%s379 + $0x28] sm:$0xf]
        %v418 = vld [vmem:[%s379 + $0x2c] sm:$0xf]
        %v419 = vld [vmem:[%s379 + $0x30] sm:$0xf]
        %v420 = vld [vmem:[%s379 + $0x34] sm:$0xf]
        %v421 = vld [vmem:[%s379 + $0x38] sm:$0xf]
        %v422 = vld [vmem:[%s379 + $0x3c] sm:$0xf]
        %p423 = scmp.eq.s32.totalorder %s29, 0
        %p424 = scmp.eq.s32.totalorder %s30, 0
        %p425 = pnand %p423, %p424
        %p426 = pneg %p425
        // Predicated region
        $region57: #{tpu_custom_call.1} parent=47 // pred_check
          _
        $region58: #{tpu_custom_call.1} parent=47 // pred_check_branch
          %428 = sbr.rel (%p425) target = $region60
        $region59: #{tpu_custom_call.1} parent=47 // pred_region
          %v429 = vld [vmem:[%s370] sm:$0xf]
          %v430 = vld [vmem:[%s370 + $0x4] sm:$0xf]
          %v431 = vld [vmem:[%s370 + $0x8] sm:$0xf]
          %v432 = vld [vmem:[%s370 + $0xc] sm:$0xf]
          %v433 = vld [vmem:[%s370 + $0x10] sm:$0xf]
          %v434 = vld [vmem:[%s370 + $0x14] sm:$0xf]
          %v435 = vld [vmem:[%s370 + $0x18] sm:$0xf]
          %v436 = vld [vmem:[%s370 + $0x1c] sm:$0xf]
          %v437 = vld [vmem:[%s370 + $0x20] sm:$0xf]
          %v438 = vld [vmem:[%s370 + $0x24] sm:$0xf]
          %v439 = vld [vmem:[%s370 + $0x28] sm:$0xf]
          %v440 = vld [vmem:[%s370 + $0x2c] sm:$0xf]
          %v441 = vld [vmem:[%s370 + $0x30] sm:$0xf]
          %v442 = vld [vmem:[%s370 + $0x34] sm:$0xf]
          %v443 = vld [vmem:[%s370 + $0x38] sm:$0xf]
          %v444 = vld [vmem:[%s370 + $0x3c] sm:$0xf]
          %v445 = vld [vmem:[#allocation4] sm:$0xf]
          %v446 = vld [vmem:[#allocation4 + $0x4] sm:$0xf]
          %v447 = vld [vmem:[#allocation4 + $0x8] sm:$0xf]
          %v448 = vld [vmem:[#allocation4 + $0xc] sm:$0xf]
          %v449 = vld [vmem:[#allocation4 + $0x10] sm:$0xf]
          %v450 = vld [vmem:[#allocation4 + $0x14] sm:$0xf]
          %v451 = vld [vmem:[#allocation4 + $0x18] sm:$0xf]
          %v452 = vld [vmem:[#allocation4 + $0x1c] sm:$0xf]
          %v453 = vld [vmem:[#allocation4 + $0x20] sm:$0xf]
          %v454 = vld [vmem:[#allocation4 + $0x24] sm:$0xf]
          %v455 = vld [vmem:[#allocation4 + $0x28] sm:$0xf]
          %v456 = vld [vmem:[#allocation4 + $0x2c] sm:$0xf]
          %v457 = vld [vmem:[#allocation4 + $0x30] sm:$0xf]
          %v458 = vld [vmem:[#allocation4 + $0x34] sm:$0xf]
          %v459 = vld [vmem:[#allocation4 + $0x38] sm:$0xf]
          %v460 = vld [vmem:[#allocation4 + $0x3c] sm:$0xf]
          %v477 = vunpack.c.l.b16 %v429
          %v478 = vunpack.c.l.b16 %v430
          %v479 = vunpack.c.l.b16 %v431
          %v480 = vunpack.c.l.b16 %v432
          %v481 = vunpack.c.l.b16 %v433
          %v482 = vunpack.c.l.b16 %v434
          %v483 = vunpack.c.l.b16 %v435
          %v484 = vunpack.c.l.b16 %v436
          %v485 = vunpack.c.l.b16 %v437
          %v486 = vunpack.c.l.b16 %v438
          %v487 = vunpack.c.l.b16 %v439
          %v488 = vunpack.c.l.b16 %v440
          %v489 = vunpack.c.l.b16 %v441
          %v490 = vunpack.c.l.b16 %v442
          %v491 = vunpack.c.l.b16 %v443
          %v492 = vunpack.c.l.b16 %v444
          %v493 = vpack.c.b16 %v478, %v477
          %v494 = vpack.c.b16 %v480, %v479
          %v495 = vpack.c.b16 %v482, %v481
          %v496 = vpack.c.b16 %v484, %v483
          %v497 = vpack.c.b16 %v486, %v485
          %v498 = vpack.c.b16 %v488, %v487
          %v499 = vpack.c.b16 %v490, %v489
          %v500 = vpack.c.b16 %v492, %v491
          %v525 = vunpack.c.l.b16 %v445
          %v526 = vunpack.c.l.b16 %v446
          %v527 = vunpack.c.l.b16 %v447
          %v528 = vunpack.c.l.b16 %v448
          %v529 = vunpack.c.l.b16 %v449
          %v530 = vunpack.c.l.b16 %v450
          %v531 = vunpack.c.l.b16 %v451
          %v532 = vunpack.c.l.b16 %v452
          %v533 = vunpack.c.l.b16 %v453
          %v534 = vunpack.c.l.b16 %v454
          %v535 = vunpack.c.l.b16 %v455
          %v536 = vunpack.c.l.b16 %v456
          %v537 = vunpack.c.l.b16 %v457
          %v538 = vunpack.c.l.b16 %v458
          %v539 = vunpack.c.l.b16 %v459
          %v540 = vunpack.c.l.b16 %v460
          %v541 = vpack.c.b16 %v526, %v525
          %v542 = vpack.c.b16 %v528, %v527
          %v543 = vpack.c.b16 %v530, %v529
          %v544 = vpack.c.b16 %v532, %v531
          %v545 = vpack.c.b16 %v534, %v533
          %v546 = vpack.c.b16 %v536, %v535
          %v547 = vpack.c.b16 %v538, %v537
          %v548 = vpack.c.b16 %v540, %v539
          %557 = vmatprep.subr.bf16.mxu0 0
          %558 = vmatpush1.bf16.msra.mxu0 %v548
          %559 = vmatprep.subr.bf16.mxu0 0
          %560 = vmatpush1.bf16.msra.mxu0 %v547
          %561 = vmatprep.subr.bf16.mxu0 0
          %562 = vmatpush1.bf16.msra.mxu0 %v546
          %563 = vmatprep.subr.bf16.mxu0 0
          %564 = vmatpush1.bf16.msra.mxu0 %v545
          %565 = vmatprep.subr.bf16.mxu0 0
          %566 = vmatpush1.bf16.msra.mxu0 %v544
          %567 = vmatprep.subr.bf16.mxu0 0
          %568 = vmatpush1.bf16.msra.mxu0 %v543
          %569 = vmatprep.subr.bf16.mxu0 0
          %570 = vmatpush1.bf16.msra.mxu0 %v542
          %571 = vmatprep.subr.bf16.mxu0 0
          %572 = vmatpush1.bf16.msra.mxu0 %v541
          %573 = vmatprep.subr.bf16.mxu0 0
          %574 = vmatpush2.bf16.msra.mxu0 0
          %575 = vmatprep.subr.bf16.mxu0 0
          %576 = vmatpush2.bf16.msra.mxu0 0
          %577 = vmatprep.subr.bf16.mxu0 0
          %578 = vmatpush2.bf16.msra.mxu0 0
          %579 = vmatprep.subr.bf16.mxu0 0
          %580 = vmatpush2.bf16.msra.mxu0 0
          %581 = vmatprep.subr.bf16.mxu0 0
          %582 = vmatpush2.bf16.msra.mxu0 0
          %583 = vmatprep.subr.bf16.mxu0 0
          %584 = vmatpush2.bf16.msra.mxu0 0
          %585 = vmatprep.subr.bf16.mxu0 0
          %586 = vmatpush2.bf16.msra.mxu0 0
          %587 = vmatprep.subr.bf16.mxu0 0
          %588 = vmatpush2.bf16.msra.mxu0 0
          %589 = vmatprep.mubr.bf16.mxu0 0
          %590 = vmatmul.mubr.bf16.gmra.mxu0 %v493
          %v591 = vpop.f32.mrf.mxu0
          %v592 = vadd.f32 0.0, %v591
          %v593 = vpop.f32.mrf.mxu0
          %v594 = vpop.f32.mrf.mxu0
          %v595 = vadd.f32 0.0, %v594
          %v596 = vpop.f32.mrf.mxu0
          %597 = vmatprep.mubr.bf16.mxu0 0
          %598 = vmatmul.mubr.bf16.gmra.mxu0 %v494
          %v599 = vpop.f32.mrf.mxu0
          %v600 = vadd.f32 0.0, %v599
          %v601 = vpop.f32.mrf.mxu0
          %v602 = vpop.f32.mrf.mxu0
          %v603 = vadd.f32 0.0, %v602
          %v604 = vpop.f32.mrf.mxu0
          %605 = vmatprep.mubr.bf16.mxu0 0
          %606 = vmatmul.mubr.bf16.gmra.mxu0 %v495
          %v607 = vpop.f32.mrf.mxu0
          %v608 = vadd.f32 0.0, %v607
          %v609 = vpop.f32.mrf.mxu0
          %v610 = vpop.f32.mrf.mxu0
          %v611 = vadd.f32 0.0, %v610
          %v612 = vpop.f32.mrf.mxu0
          %613 = vmatprep.mubr.bf16.mxu0 0
          %614 = vmatmul.mubr.bf16.gmra.mxu0 %v496
          %v615 = vpop.f32.mrf.mxu0
          %v616 = vadd.f32 0.0, %v615
          %v617 = vpop.f32.mrf.mxu0
          %v618 = vpop.f32.mrf.mxu0
          %v619 = vadd.f32 0.0, %v618
          %v620 = vpop.f32.mrf.mxu0
          %621 = vmatprep.mubr.bf16.mxu0 0
          %622 = vmatmul.mubr.bf16.gmra.mxu0 %v497
          %v623 = vpop.f32.mrf.mxu0
          %v624 = vadd.f32 0.0, %v623
          %v625 = vpop.f32.mrf.mxu0
          %v626 = vpop.f32.mrf.mxu0
          %v627 = vadd.f32 0.0, %v626
          %v628 = vpop.f32.mrf.mxu0
          %629 = vmatprep.mubr.bf16.mxu0 0
          %630 = vmatmul.mubr.bf16.gmra.mxu0 %v498
          %v631 = vpop.f32.mrf.mxu0
          %v632 = vadd.f32 0.0, %v631
          %v633 = vpop.f32.mrf.mxu0
          %v634 = vpop.f32.mrf.mxu0
          %v635 = vadd.f32 0.0, %v634
          %v636 = vpop.f32.mrf.mxu0
          %637 = vmatprep.mubr.bf16.mxu0 0
          %638 = vmatmul.mubr.bf16.gmra.mxu0 %v499
          %v639 = vpop.f32.mrf.mxu0
          %v640 = vadd.f32 0.0, %v639
          %v641 = vpop.f32.mrf.mxu0
          %v642 = vpop.f32.mrf.mxu0
          %v643 = vadd.f32 0.0, %v642
          %v644 = vpop.f32.mrf.mxu0
          %645 = vmatprep.mubr.bf16.mxu0 0
          %646 = vmatmul.mubr.bf16.gmra.mxu0 %v500
          %v647 = vpop.f32.mrf.mxu0
          %v648 = vadd.f32 0.0, %v647
          %v649 = vpop.f32.mrf.mxu0
          %v650 = vpop.f32.mrf.mxu0
          %v651 = vadd.f32 0.0, %v650
          %v652 = vpop.f32.mrf.mxu0
          %653 = vdwg.mxu0
          %v654 = vld [vmem:[%s385] sm:$0xff]
          %v655 = vld [vmem:[%s385 + $0x8] sm:$0xff]
          %v656 = vld [vmem:[%s385 + $0x10] sm:$0xff]
          %v657 = vld [vmem:[%s385 + $0x18] sm:$0xff]
          %v658 = vld [vmem:[%s385 + $0x20] sm:$0xff]
          %v659 = vld [vmem:[%s385 + $0x28] sm:$0xff]
          %v660 = vld [vmem:[%s385 + $0x30] sm:$0xff]
          %v661 = vld [vmem:[%s385 + $0x38] sm:$0xff]
          %v662 = vld [vmem:[%s385 + $0x40] sm:$0xff]
          %v663 = vld [vmem:[%s385 + $0x48] sm:$0xff]
          %v664 = vld [vmem:[%s385 + $0x50] sm:$0xff]
          %v665 = vld [vmem:[%s385 + $0x58] sm:$0xff]
          %v666 = vld [vmem:[%s385 + $0x60] sm:$0xff]
          %v667 = vld [vmem:[%s385 + $0x68] sm:$0xff]
          %v668 = vld [vmem:[%s385 + $0x70] sm:$0xff]
          %v669 = vld [vmem:[%s385 + $0x78] sm:$0xff]
          %671 = vset.pattern.permute.xlu0 0
          %672 = vperm.xlu0 %671, %v654
          %v673 = vpop.permute.xlu0 %672
          %676 = vset.pattern.permute.xlu0 0
          %677 = vperm.xlu0 %676, %v655
          %v678 = vpop.permute.xlu0 %677
          %681 = vset.pattern.permute.xlu0 0
          %682 = vperm.xlu0 %681, %v656
          %v683 = vpop.permute.xlu0 %682
          %686 = vset.pattern.permute.xlu0 0
          %687 = vperm.xlu0 %686, %v657
          %v688 = vpop.permute.xlu0 %687
          %691 = vset.pattern.permute.xlu0 0
          %692 = vperm.xlu0 %691, %v658
          %v693 = vpop.permute.xlu0 %692
          %696 = vset.pattern.permute.xlu0 0
          %697 = vperm.xlu0 %696, %v659
          %v698 = vpop.permute.xlu0 %697
          %701 = vset.pattern.permute.xlu0 0
          %702 = vperm.xlu0 %701, %v660
          %v703 = vpop.permute.xlu0 %702
          %706 = vset.pattern.permute.xlu0 0
          %707 = vperm.xlu0 %706, %v661
          %v708 = vpop.permute.xlu0 %707
          %711 = vset.pattern.permute.xlu0 0
          %712 = vperm.xlu0 %711, %v662
          %v713 = vpop.permute.xlu0 %712
          %716 = vset.pattern.permute.xlu0 0
          %717 = vperm.xlu0 %716, %v663
          %v718 = vpop.permute.xlu0 %717
          %721 = vset.pattern.permute.xlu0 0
          %722 = vperm.xlu0 %721, %v664
          %v723 = vpop.permute.xlu0 %722
          %726 = vset.pattern.permute.xlu0 0
          %727 = vperm.xlu0 %726, %v665
          %v728 = vpop.permute.xlu0 %727
          %731 = vset.pattern.permute.xlu0 0
          %732 = vperm.xlu0 %731, %v666
          %v733 = vpop.permute.xlu0 %732
          %736 = vset.pattern.permute.xlu0 0
          %737 = vperm.xlu0 %736, %v667
          %v738 = vpop.permute.xlu0 %737
          %741 = vset.pattern.permute.xlu0 0
          %742 = vperm.xlu0 %741, %v668
          %v743 = vpop.permute.xlu0 %742
          %746 = vset.pattern.permute.xlu0 0
          %747 = vperm.xlu0 %746, %v669
          %v748 = vpop.permute.xlu0 %747
          %v750 = vmul.f32 %v673, %v592
          %v751 = vmul.f32 %v678, %v595
          %v752 = vmul.f32 %v683, %v600
          %v753 = vmul.f32 %v688, %v603
          %v754 = vmul.f32 %v693, %v608
          %v755 = vmul.f32 %v698, %v611
          %v756 = vmul.f32 %v703, %v616
          %v757 = vmul.f32 %v708, %v619
          %v758 = vmul.f32 %v713, %v624
          %v759 = vmul.f32 %v718, %v627
          %v760 = vmul.f32 %v723, %v632
          %v761 = vmul.f32 %v728, %v635
          %v762 = vmul.f32 %v733, %v640
          %v763 = vmul.f32 %v738, %v643
          %v764 = vmul.f32 %v743, %v648
          %v765 = vmul.f32 %v748, %v651
          %v766 = vpack.c.bf16 %v751, %v750
          %v767 = vpack.c.bf16 %v753, %v752
          %v768 = vpack.c.bf16 %v755, %v754
          %v769 = vpack.c.bf16 %v757, %v756
          %v770 = vpack.c.bf16 %v759, %v758
          %v771 = vpack.c.bf16 %v761, %v760
          %v772 = vpack.c.bf16 %v763, %v762
          %v773 = vpack.c.bf16 %v765, %v764
          %v782 = vunpack.c.l.b16 %v766
          %v783 = vunpack.c.h.b16 %v766
          %v784 = vunpack.c.l.b16 %v767
          %v785 = vunpack.c.h.b16 %v767
          %v786 = vunpack.c.l.b16 %v768
          %v787 = vunpack.c.h.b16 %v768
          %v788 = vunpack.c.l.b16 %v769
          %v789 = vunpack.c.h.b16 %v769
          %v790 = vunpack.c.l.b16 %v770
          %v791 = vunpack.c.h.b16 %v770
          %v792 = vunpack.c.l.b16 %v771
          %v793 = vunpack.c.h.b16 %v771
          %v794 = vunpack.c.l.b16 %v772
          %v795 = vunpack.c.h.b16 %v772
          %v796 = vunpack.c.l.b16 %v773
          %v797 = vunpack.c.h.b16 %v773
          %v798 = vpack.c.b16 %v782, %v782
          %v799 = vpack.c.b16 %v783, %v783
          %v800 = vpack.c.b16 %v784, %v784
          %v801 = vpack.c.b16 %v785, %v785
          %v802 = vpack.c.b16 %v786, %v786
          %v803 = vpack.c.b16 %v787, %v787
          %v804 = vpack.c.b16 %v788, %v788
          %v805 = vpack.c.b16 %v789, %v789
          %v806 = vpack.c.b16 %v790, %v790
          %v807 = vpack.c.b16 %v791, %v791
          %v808 = vpack.c.b16 %v792, %v792
          %v809 = vpack.c.b16 %v793, %v793
          %v810 = vpack.c.b16 %v794, %v794
          %v811 = vpack.c.b16 %v795, %v795
          %v812 = vpack.c.b16 %v796, %v796
          %v813 = vpack.c.b16 %v797, %v797
          %830 = vst [vmem:[#allocation2] sm:$0xf] %v798
          %831 = vst [vmem:[#allocation2 + $0x4] sm:$0xf] %v799
          %832 = vst [vmem:[#allocation2 + $0x8] sm:$0xf] %v800
          %833 = vst [vmem:[#allocation2 + $0xc] sm:$0xf] %v801
          %834 = vst [vmem:[#allocation2 + $0x10] sm:$0xf] %v802
          %835 = vst [vmem:[#allocation2 + $0x14] sm:$0xf] %v803
          %836 = vst [vmem:[#allocation2 + $0x18] sm:$0xf] %v804
          %837 = vst [vmem:[#allocation2 + $0x1c] sm:$0xf] %v805
          %838 = vst [vmem:[#allocation2 + $0x20] sm:$0xf] %v806
          %839 = vst [vmem:[#allocation2 + $0x24] sm:$0xf] %v807
          %840 = vst [vmem:[#allocation2 + $0x28] sm:$0xf] %v808
          %841 = vst [vmem:[#allocation2 + $0x2c] sm:$0xf] %v809
          %842 = vst [vmem:[#allocation2 + $0x30] sm:$0xf] %v810
          %843 = vst [vmem:[#allocation2 + $0x34] sm:$0xf] %v811
          %844 = vst [vmem:[#allocation2 + $0x38] sm:$0xf] %v812
          %845 = vst [vmem:[#allocation2 + $0x3c] sm:$0xf] %v813
        $region60: #{tpu_custom_call.1} parent=47 // pred_fallthru
          _
        // Predicated region
        $region61: #{tpu_custom_call.1} parent=47 // pred_check
          %p846 = pneg %p423
        $region62: #{tpu_custom_call.1} parent=47 // pred_check_branch
          %848 = sbr.rel (%p846) target = $region64
        $region63: #{tpu_custom_call.1} parent=47 // pred_region
          %v849 = vld [vmem:[#allocation2] sm:$0xf]
          %v850 = vld [vmem:[#allocation2 + $0x4] sm:$0xf]
          %v851 = vld [vmem:[#allocation2 + $0x8] sm:$0xf]
          %v852 = vld [vmem:[#allocation2 + $0xc] sm:$0xf]
          %v853 = vld [vmem:[#allocation2 + $0x10] sm:$0xf]
          %v854 = vld [vmem:[#allocation2 + $0x14] sm:$0xf]
          %v855 = vld [vmem:[#allocation2 + $0x18] sm:$0xf]
          %v856 = vld [vmem:[#allocation2 + $0x1c] sm:$0xf]
          %v857 = vld [vmem:[#allocation2 + $0x20] sm:$0xf]
          %v858 = vld [vmem:[#allocation2 + $0x24] sm:$0xf]
          %v859 = vld [vmem:[#allocation2 + $0x28] sm:$0xf]
          %v860 = vld [vmem:[#allocation2 + $0x2c] sm:$0xf]
          %v861 = vld [vmem:[#allocation2 + $0x30] sm:$0xf]
          %v862 = vld [vmem:[#allocation2 + $0x34] sm:$0xf]
          %v863 = vld [vmem:[#allocation2 + $0x38] sm:$0xf]
          %v864 = vld [vmem:[#allocation2 + $0x3c] sm:$0xf]
          %v881 = vunpack.c.l.b16 %v407
          %v882 = vunpack.c.l.b16 %v408
          %v883 = vunpack.c.l.b16 %v409
          %v884 = vunpack.c.l.b16 %v410
          %v885 = vunpack.c.l.b16 %v411
          %v886 = vunpack.c.l.b16 %v412
          %v887 = vunpack.c.l.b16 %v413
          %v888 = vunpack.c.l.b16 %v414
          %v889 = vunpack.c.l.b16 %v415
          %v890 = vunpack.c.l.b16 %v416
          %v891 = vunpack.c.l.b16 %v417
          %v892 = vunpack.c.l.b16 %v418
          %v893 = vunpack.c.l.b16 %v419
          %v894 = vunpack.c.l.b16 %v420
          %v895 = vunpack.c.l.b16 %v421
          %v896 = vunpack.c.l.b16 %v422
          %v897 = vpack.c.b16 %v882, %v881
          %v898 = vpack.c.b16 %v884, %v883
          %v899 = vpack.c.b16 %v886, %v885
          %v900 = vpack.c.b16 %v888, %v887
          %v901 = vpack.c.b16 %v890, %v889
          %v902 = vpack.c.b16 %v892, %v891
          %v903 = vpack.c.b16 %v894, %v893
          %v904 = vpack.c.b16 %v896, %v895
          %v929 = vunpack.c.l.b16 %v849
          %v930 = vunpack.c.l.b16 %v850
          %v931 = vunpack.c.l.b16 %v851
          %v932 = vunpack.c.l.b16 %v852
          %v933 = vunpack.c.l.b16 %v853
          %v934 = vunpack.c.l.b16 %v854
          %v935 = vunpack.c.l.b16 %v855
          %v936 = vunpack.c.l.b16 %v856
          %v937 = vunpack.c.l.b16 %v857
          %v938 = vunpack.c.l.b16 %v858
          %v939 = vunpack.c.l.b16 %v859
          %v940 = vunpack.c.l.b16 %v860
          %v941 = vunpack.c.l.b16 %v861
          %v942 = vunpack.c.l.b16 %v862
          %v943 = vunpack.c.l.b16 %v863
          %v944 = vunpack.c.l.b16 %v864
          %v945 = vpack.c.b16 %v930, %v929
          %v946 = vpack.c.b16 %v932, %v931
          %v947 = vpack.c.b16 %v934, %v933
          %v948 = vpack.c.b16 %v936, %v935
          %v949 = vpack.c.b16 %v938, %v937
          %v950 = vpack.c.b16 %v940, %v939
          %v951 = vpack.c.b16 %v942, %v941
          %v952 = vpack.c.b16 %v944, %v943
          %961 = vmatprep.subr.bf16.mxu0 0
          %962 = vmatpush1.bf16.msra.mxu0 %v952
          %963 = vmatprep.subr.bf16.mxu0 0
          %964 = vmatpush1.bf16.msra.mxu0 %v951
          %965 = vmatprep.subr.bf16.mxu0 0
          %966 = vmatpush1.bf16.msra.mxu0 %v950
          %967 = vmatprep.subr.bf16.mxu0 0
          %968 = vmatpush1.bf16.msra.mxu0 %v949
          %969 = vmatprep.subr.bf16.mxu0 0
          %970 = vmatpush1.bf16.msra.mxu0 %v948
          %971 = vmatprep.subr.bf16.mxu0 0
          %972 = vmatpush1.bf16.msra.mxu0 %v947
          %973 = vmatprep.subr.bf16.mxu0 0
          %974 = vmatpush1.bf16.msra.mxu0 %v946
          %975 = vmatprep.subr.bf16.mxu0 0
          %976 = vmatpush1.bf16.msra.mxu0 %v945
          %977 = vmatprep.subr.bf16.mxu0 0
          %978 = vmatpush2.bf16.msra.mxu0 0
          %979 = vmatprep.subr.bf16.mxu0 0
          %980 = vmatpush2.bf16.msra.mxu0 0
          %981 = vmatprep.subr.bf16.mxu0 0
          %982 = vmatpush2.bf16.msra.mxu0 0
          %983 = vmatprep.subr.bf16.mxu0 0
          %984 = vmatpush2.bf16.msra.mxu0 0
          %985 = vmatprep.subr.bf16.mxu0 0
          %986 = vmatpush2.bf16.msra.mxu0 0
          %987 = vmatprep.subr.bf16.mxu0 0
          %988 = vmatpush2.bf16.msra.mxu0 0
          %989 = vmatprep.subr.bf16.mxu0 0
          %990 = vmatpush2.bf16.msra.mxu0 0
          %991 = vmatprep.subr.bf16.mxu0 0
          %992 = vmatpush2.bf16.msra.mxu0 0
          %993 = vmatprep.mubr.bf16.mxu0 0
          %994 = vmatmul.mubr.bf16.gmra.mxu0 %v897
          %v995 = vpop.f32.mrf.mxu0
          %v996 = vadd.f32 0.0, %v995
          %v997 = vpop.f32.mrf.mxu0
          %v998 = vpop.f32.mrf.mxu0
          %v999 = vadd.f32 0.0, %v998
          %v1000 = vpop.f32.mrf.mxu0
          %1001 = vmatprep.mubr.bf16.mxu0 0
          %1002 = vmatmul.mubr.bf16.gmra.mxu0 %v898
          %v1003 = vpop.f32.mrf.mxu0
          %v1004 = vadd.f32 0.0, %v1003
          %v1005 = vpop.f32.mrf.mxu0
          %v1006 = vpop.f32.mrf.mxu0
          %v1007 = vadd.f32 0.0, %v1006
          %v1008 = vpop.f32.mrf.mxu0
          %1009 = vmatprep.mubr.bf16.mxu0 0
          %1010 = vmatmul.mubr.bf16.gmra.mxu0 %v899
          %v1011 = vpop.f32.mrf.mxu0
          %v1012 = vadd.f32 0.0, %v1011
          %v1013 = vpop.f32.mrf.mxu0
          %v1014 = vpop.f32.mrf.mxu0
          %v1015 = vadd.f32 0.0, %v1014
          %v1016 = vpop.f32.mrf.mxu0
          %1017 = vmatprep.mubr.bf16.mxu0 0
          %1018 = vmatmul.mubr.bf16.gmra.mxu0 %v900
          %v1019 = vpop.f32.mrf.mxu0
          %v1020 = vadd.f32 0.0, %v1019
          %v1021 = vpop.f32.mrf.mxu0
          %v1022 = vpop.f32.mrf.mxu0
          %v1023 = vadd.f32 0.0, %v1022
          %v1024 = vpop.f32.mrf.mxu0
          %1025 = vmatprep.mubr.bf16.mxu0 0
          %1026 = vmatmul.mubr.bf16.gmra.mxu0 %v901
          %v1027 = vpop.f32.mrf.mxu0
          %v1028 = vadd.f32 0.0, %v1027
          %v1029 = vpop.f32.mrf.mxu0
          %v1030 = vpop.f32.mrf.mxu0
          %v1031 = vadd.f32 0.0, %v1030
          %v1032 = vpop.f32.mrf.mxu0
          %1033 = vmatprep.mubr.bf16.mxu0 0
          %1034 = vmatmul.mubr.bf16.gmra.mxu0 %v902
          %v1035 = vpop.f32.mrf.mxu0
          %v1036 = vadd.f32 0.0, %v1035
          %v1037 = vpop.f32.mrf.mxu0
          %v1038 = vpop.f32.mrf.mxu0
          %v1039 = vadd.f32 0.0, %v1038
          %v1040 = vpop.f32.mrf.mxu0
          %1041 = vmatprep.mubr.bf16.mxu0 0
          %1042 = vmatmul.mubr.bf16.gmra.mxu0 %v903
          %v1043 = vpop.f32.mrf.mxu0
          %v1044 = vadd.f32 0.0, %v1043
          %v1045 = vpop.f32.mrf.mxu0
          %v1046 = vpop.f32.mrf.mxu0
          %v1047 = vadd.f32 0.0, %v1046
          %v1048 = vpop.f32.mrf.mxu0
          %1049 = vmatprep.mubr.bf16.mxu0 0
          %1050 = vmatmul.mubr.bf16.gmra.mxu0 %v904
          %v1051 = vpop.f32.mrf.mxu0
          %v1052 = vadd.f32 0.0, %v1051
          %v1053 = vpop.f32.mrf.mxu0
          %v1054 = vpop.f32.mrf.mxu0
          %v1055 = vadd.f32 0.0, %v1054
          %v1056 = vpop.f32.mrf.mxu0
          %1057 = vdwg.mxu0
          %1059 = vset.pattern.permute.xlu0 0
          %1060 = vperm.xlu0 %1059, %v391
          %v1061 = vpop.permute.xlu0 %1060
          %1064 = vset.pattern.permute.xlu0 0
          %1065 = vperm.xlu0 %1064, %v392
          %v1066 = vpop.permute.xlu0 %1065
          %1069 = vset.pattern.permute.xlu0 0
          %1070 = vperm.xlu0 %1069, %v393
          %v1071 = vpop.permute.xlu0 %1070
          %1074 = vset.pattern.permute.xlu0 0
          %1075 = vperm.xlu0 %1074, %v394
          %v1076 = vpop.permute.xlu0 %1075
          %1079 = vset.pattern.permute.xlu0 0
          %1080 = vperm.xlu0 %1079, %v395
          %v1081 = vpop.permute.xlu0 %1080
          %1084 = vset.pattern.permute.xlu0 0
          %1085 = vperm.xlu0 %1084, %v396
          %v1086 = vpop.permute.xlu0 %1085
          %1089 = vset.pattern.permute.xlu0 0
          %1090 = vperm.xlu0 %1089, %v397
          %v1091 = vpop.permute.xlu0 %1090
          %1094 = vset.pattern.permute.xlu0 0
          %1095 = vperm.xlu0 %1094, %v398
          %v1096 = vpop.permute.xlu0 %1095
          %1099 = vset.pattern.permute.xlu0 0
          %1100 = vperm.xlu0 %1099, %v399
          %v1101 = vpop.permute.xlu0 %1100
          %1104 = vset.pattern.permute.xlu0 0
          %1105 = vperm.xlu0 %1104, %v400
          %v1106 = vpop.permute.xlu0 %1105
          %1109 = vset.pattern.permute.xlu0 0
          %1110 = vperm.xlu0 %1109, %v401
          %v1111 = vpop.permute.xlu0 %1110
          %1114 = vset.pattern.permute.xlu0 0
          %1115 = vperm.xlu0 %1114, %v402
          %v1116 = vpop.permute.xlu0 %1115
          %1119 = vset.pattern.permute.xlu0 0
          %1120 = vperm.xlu0 %1119, %v403
          %v1121 = vpop.permute.xlu0 %1120
          %1124 = vset.pattern.permute.xlu0 0
          %1125 = vperm.xlu0 %1124, %v404
          %v1126 = vpop.permute.xlu0 %1125
          %1129 = vset.pattern.permute.xlu0 0
          %1130 = vperm.xlu0 %1129, %v405
          %v1131 = vpop.permute.xlu0 %1130
          %1134 = vset.pattern.permute.xlu0 0
          %1135 = vperm.xlu0 %1134, %v406
          %v1136 = vpop.permute.xlu0 %1135
          %v1138 = vmul.f32 %v1061, %v996
          %v1139 = vmul.f32 %v1066, %v999
          %v1140 = vmul.f32 %v1071, %v1004
          %v1141 = vmul.f32 %v1076, %v1007
          %v1142 = vmul.f32 %v1081, %v1012
          %v1143 = vmul.f32 %v1086, %v1015
          %v1144 = vmul.f32 %v1091, %v1020
          %v1145 = vmul.f32 %v1096, %v1023
          %v1146 = vmul.f32 %v1101, %v1028
          %v1147 = vmul.f32 %v1106, %v1031
          %v1148 = vmul.f32 %v1111, %v1036
          %v1149 = vmul.f32 %v1116, %v1039
          %v1150 = vmul.f32 %v1121, %v1044
          %v1151 = vmul.f32 %v1126, %v1047
          %v1152 = vmul.f32 %v1131, %v1052
          %v1153 = vmul.f32 %v1136, %v1055
          %v1154 = vld [vmem:[%s4] sm:$0x1]
          %v1156 = vlaneseq
          %v1157 = vshrl.u32 %v1156, 7
          %v1158 = vsub.s32 0, %v1157
          %v1159 = vrot.slane %v1154, %v1158
          %v1161 = vadd.f32 %v1138, %v1159
          %v1162 = vadd.f32 %v1139, %v1159
          %v1163 = vadd.f32 %v1140, %v1159
          %v1164 = vadd.f32 %v1141, %v1159
          %v1165 = vadd.f32 %v1142, %v1159
          %v1166 = vadd.f32 %v1143, %v1159
          %v1167 = vadd.f32 %v1144, %v1159
          %v1168 = vadd.f32 %v1145, %v1159
          %v1169 = vadd.f32 %v1146, %v1159
          %v1170 = vadd.f32 %v1147, %v1159
          %v1171 = vadd.f32 %v1148, %v1159
          %v1172 = vadd.f32 %v1149, %v1159
          %v1173 = vadd.f32 %v1150, %v1159
          %v1174 = vadd.f32 %v1151, %v1159
          %v1175 = vadd.f32 %v1152, %v1159
          %v1176 = vadd.f32 %v1153, %v1159
          %v1177 = vmax.f32 %v1161, 0.0
          %v1178 = vmax.f32 %v1162, 0.0
          %v1179 = vmax.f32 %v1163, 0.0
          %v1180 = vmax.f32 %v1164, 0.0
          %v1181 = vmax.f32 %v1165, 0.0
          %v1182 = vmax.f32 %v1166, 0.0
          %v1183 = vmax.f32 %v1167, 0.0
          %v1184 = vmax.f32 %v1168, 0.0
          %v1185 = vmax.f32 %v1169, 0.0
          %v1186 = vmax.f32 %v1170, 0.0
          %v1187 = vmax.f32 %v1171, 0.0
          %v1188 = vmax.f32 %v1172, 0.0
          %v1189 = vmax.f32 %v1173, 0.0
          %v1190 = vmax.f32 %v1174, 0.0
          %v1191 = vmax.f32 %v1175, 0.0
          %v1192 = vmax.f32 %v1176, 0.0
          %v1193 = vpack.c.bf16 %v1178, %v1177
          %v1194 = vpack.c.bf16 %v1180, %v1179
          %v1195 = vpack.c.bf16 %v1182, %v1181
          %v1196 = vpack.c.bf16 %v1184, %v1183
          %v1197 = vpack.c.bf16 %v1186, %v1185
          %v1198 = vpack.c.bf16 %v1188, %v1187
          %v1199 = vpack.c.bf16 %v1190, %v1189
          %v1200 = vpack.c.bf16 %v1192, %v1191
          %v1201 = vld [vmem:[#allocation7] sm:$0xf]
          %v1202 = vld [vmem:[#allocation7 + $0x4] sm:$0xf]
          %v1203 = vld [vmem:[#allocation7 + $0x8] sm:$0xf]
          %v1204 = vld [vmem:[#allocation7 + $0xc] sm:$0xf]
          %v1205 = vld [vmem:[#allocation7 + $0x10] sm:$0xf]
          %v1206 = vld [vmem:[#allocation7 + $0x14] sm:$0xf]
          %v1207 = vld [vmem:[#allocation7 + $0x18] sm:$0xf]
          %v1208 = vld [vmem:[#allocation7 + $0x1c] sm:$0xf]
          %v1209 = vld [vmem:[#allocation7 + $0x20] sm:$0xf]
          %v1210 = vld [vmem:[#allocation7 + $0x24] sm:$0xf]
          %v1211 = vld [vmem:[#allocation7 + $0x28] sm:$0xf]
          %v1212 = vld [vmem:[#allocation7 + $0x2c] sm:$0xf]
          %v1213 = vld [vmem:[#allocation7 + $0x30] sm:$0xf]
          %v1214 = vld [vmem:[#allocation7 + $0x34] sm:$0xf]
          %v1215 = vld [vmem:[#allocation7 + $0x38] sm:$0xf]
          %v1216 = vld [vmem:[#allocation7 + $0x3c] sm:$0xf]
          %v1233 = vunpack.c.l.b16 %v1201
          %v1234 = vunpack.c.l.b16 %v1202
          %v1235 = vunpack.c.l.b16 %v1203
          %v1236 = vunpack.c.l.b16 %v1204
          %v1237 = vunpack.c.l.b16 %v1205
          %v1238 = vunpack.c.l.b16 %v1206
          %v1239 = vunpack.c.l.b16 %v1207
          %v1240 = vunpack.c.l.b16 %v1208
          %v1241 = vunpack.c.l.b16 %v1209
          %v1242 = vunpack.c.l.b16 %v1210
          %v1243 = vunpack.c.l.b16 %v1211
          %v1244 = vunpack.c.l.b16 %v1212
          %v1245 = vunpack.c.l.b16 %v1213
          %v1246 = vunpack.c.l.b16 %v1214
          %v1247 = vunpack.c.l.b16 %v1215
          %v1248 = vunpack.c.l.b16 %v1216
          %v1249 = vpack.c.b16 %v1234, %v1233
          %v1250 = vpack.c.b16 %v1236, %v1235
          %v1251 = vpack.c.b16 %v1238, %v1237
          %v1252 = vpack.c.b16 %v1240, %v1239
          %v1253 = vpack.c.b16 %v1242, %v1241
          %v1254 = vpack.c.b16 %v1244, %v1243
          %v1255 = vpack.c.b16 %v1246, %v1245
          %v1256 = vpack.c.b16 %v1248, %v1247
          %1265 = vmatprep.subr.bf16.mxu0 0
          %1266 = vmatpush1.bf16.msra.mxu0 %v1256
          %1267 = vmatprep.subr.bf16.mxu0 0
          %1268 = vmatpush1.bf16.msra.mxu0 %v1255
          %1269 = vmatprep.subr.bf16.mxu0 0
          %1270 = vmatpush1.bf16.msra.mxu0 %v1254
          %1271 = vmatprep.subr.bf16.mxu0 0
          %1272 = vmatpush1.bf16.msra.mxu0 %v1253
          %1273 = vmatprep.subr.bf16.mxu0 0
          %1274 = vmatpush1.bf16.msra.mxu0 %v1252
          %1275 = vmatprep.subr.bf16.mxu0 0
          %1276 = vmatpush1.bf16.msra.mxu0 %v1251
          %1277 = vmatprep.subr.bf16.mxu0 0
          %1278 = vmatpush1.bf16.msra.mxu0 %v1250
          %1279 = vmatprep.subr.bf16.mxu0 0
          %1280 = vmatpush1.bf16.msra.mxu0 %v1249
          %1281 = vmatprep.subr.bf16.mxu0 0
          %1282 = vmatpush2.bf16.msra.mxu0 0
          %1283 = vmatprep.subr.bf16.mxu0 0
          %1284 = vmatpush2.bf16.msra.mxu0 0
          %1285 = vmatprep.subr.bf16.mxu0 0
          %1286 = vmatpush2.bf16.msra.mxu0 0
          %1287 = vmatprep.subr.bf16.mxu0 0
          %1288 = vmatpush2.bf16.msra.mxu0 0
          %1289 = vmatprep.subr.bf16.mxu0 0
          %1290 = vmatpush2.bf16.msra.mxu0 0
          %1291 = vmatprep.subr.bf16.mxu0 0
          %1292 = vmatpush2.bf16.msra.mxu0 0
          %1293 = vmatprep.subr.bf16.mxu0 0
          %1294 = vmatpush2.bf16.msra.mxu0 0
          %1295 = vmatprep.subr.bf16.mxu0 0
          %1296 = vmatpush2.bf16.msra.mxu0 0
          %1297 = vmatprep.mubr.bf16.mxu0 0
          %1298 = vmatmul.mubr.bf16.gmra.mxu0 %v1193
          %v1299 = vpop.f32.mrf.mxu0
          %v1300 = vadd.f32 0.0, %v1299
          %v1301 = vpop.f32.mrf.mxu0
          %v1302 = vpop.f32.mrf.mxu0
          %v1303 = vadd.f32 0.0, %v1302
          %v1304 = vpop.f32.mrf.mxu0
          %1305 = vmatprep.mubr.bf16.mxu0 0
          %1306 = vmatmul.mubr.bf16.gmra.mxu0 %v1194
          %v1307 = vpop.f32.mrf.mxu0
          %v1308 = vadd.f32 0.0, %v1307
          %v1309 = vpop.f32.mrf.mxu0
          %v1310 = vpop.f32.mrf.mxu0
          %v1311 = vadd.f32 0.0, %v1310
          %v1312 = vpop.f32.mrf.mxu0
          %1313 = vmatprep.mubr.bf16.mxu0 0
          %1314 = vmatmul.mubr.bf16.gmra.mxu0 %v1195
          %v1315 = vpop.f32.mrf.mxu0
          %v1316 = vadd.f32 0.0, %v1315
          %v1317 = vpop.f32.mrf.mxu0
          %v1318 = vpop.f32.mrf.mxu0
          %v1319 = vadd.f32 0.0, %v1318
          %v1320 = vpop.f32.mrf.mxu0
          %1321 = vmatprep.mubr.bf16.mxu0 0
          %1322 = vmatmul.mubr.bf16.gmra.mxu0 %v1196
          %v1323 = vpop.f32.mrf.mxu0
          %v1324 = vadd.f32 0.0, %v1323
          %v1325 = vpop.f32.mrf.mxu0
          %v1326 = vpop.f32.mrf.mxu0
          %v1327 = vadd.f32 0.0, %v1326
          %v1328 = vpop.f32.mrf.mxu0
          %1329 = vmatprep.mubr.bf16.mxu0 0
          %1330 = vmatmul.mubr.bf16.gmra.mxu0 %v1197
          %v1331 = vpop.f32.mrf.mxu0
          %v1332 = vadd.f32 0.0, %v1331
          %v1333 = vpop.f32.mrf.mxu0
          %v1334 = vpop.f32.mrf.mxu0
          %v1335 = vadd.f32 0.0, %v1334
          %v1336 = vpop.f32.mrf.mxu0
          %1337 = vmatprep.mubr.bf16.mxu0 0
          %1338 = vmatmul.mubr.bf16.gmra.mxu0 %v1198
          %v1339 = vpop.f32.mrf.mxu0
          %v1340 = vadd.f32 0.0, %v1339
          %v1341 = vpop.f32.mrf.mxu0
          %v1342 = vpop.f32.mrf.mxu0
          %v1343 = vadd.f32 0.0, %v1342
          %v1344 = vpop.f32.mrf.mxu0
          %1345 = vmatprep.mubr.bf16.mxu0 0
          %1346 = vmatmul.mubr.bf16.gmra.mxu0 %v1199
          %v1347 = vpop.f32.mrf.mxu0
          %v1348 = vadd.f32 0.0, %v1347
          %v1349 = vpop.f32.mrf.mxu0
          %v1350 = vpop.f32.mrf.mxu0
          %v1351 = vadd.f32 0.0, %v1350
          %v1352 = vpop.f32.mrf.mxu0
          %1353 = vmatprep.mubr.bf16.mxu0 0
          %1354 = vmatmul.mubr.bf16.gmra.mxu0 %v1200
          %v1355 = vpop.f32.mrf.mxu0
          %v1356 = vadd.f32 0.0, %v1355
          %v1357 = vpop.f32.mrf.mxu0
          %v1358 = vpop.f32.mrf.mxu0
          %v1359 = vadd.f32 0.0, %v1358
          %v1360 = vpop.f32.mrf.mxu0
          %1361 = vdwg.mxu0
          %v1362 = vmul.f32 %v1061, %v1300
          %v1363 = vmul.f32 %v1066, %v1303
          %v1364 = vmul.f32 %v1071, %v1308
          %v1365 = vmul.f32 %v1076, %v1311
          %v1366 = vmul.f32 %v1081, %v1316
          %v1367 = vmul.f32 %v1086, %v1319
          %v1368 = vmul.f32 %v1091, %v1324
          %v1369 = vmul.f32 %v1096, %v1327
          %v1370 = vmul.f32 %v1101, %v1332
          %v1371 = vmul.f32 %v1106, %v1335
          %v1372 = vmul.f32 %v1111, %v1340
          %v1373 = vmul.f32 %v1116, %v1343
          %v1374 = vmul.f32 %v1121, %v1348
          %v1375 = vmul.f32 %v1126, %v1351
          %v1376 = vmul.f32 %v1131, %v1356
          %v1377 = vmul.f32 %v1136, %v1359
          %v1378 = vpack.c.bf16 %v1363, %v1362
          %v1379 = vpack.c.bf16 %v1365, %v1364
          %v1380 = vpack.c.bf16 %v1367, %v1366
          %v1381 = vpack.c.bf16 %v1369, %v1368
          %v1382 = vpack.c.bf16 %v1371, %v1370
          %v1383 = vpack.c.bf16 %v1373, %v1372
          %v1384 = vpack.c.bf16 %v1375, %v1374
          %v1385 = vpack.c.bf16 %v1377, %v1376
          %v1394 = vunpack.c.l.b16 %v1378
          %v1395 = vunpack.c.h.b16 %v1378
          %v1396 = vunpack.c.l.b16 %v1379
          %v1397 = vunpack.c.h.b16 %v1379
          %v1398 = vunpack.c.l.b16 %v1380
          %v1399 = vunpack.c.h.b16 %v1380
          %v1400 = vunpack.c.l.b16 %v1381
          %v1401 = vunpack.c.h.b16 %v1381
          %v1402 = vunpack.c.l.b16 %v1382
          %v1403 = vunpack.c.h.b16 %v1382
          %v1404 = vunpack.c.l.b16 %v1383
          %v1405 = vunpack.c.h.b16 %v1383
          %v1406 = vunpack.c.l.b16 %v1384
          %v1407 = vunpack.c.h.b16 %v1384
          %v1408 = vunpack.c.l.b16 %v1385
          %v1409 = vunpack.c.h.b16 %v1385
          %v1410 = vpack.c.b16 %v1394, %v1394
          %v1411 = vpack.c.b16 %v1395, %v1395
          %v1412 = vpack.c.b16 %v1396, %v1396
          %v1413 = vpack.c.b16 %v1397, %v1397
          %v1414 = vpack.c.b16 %v1398, %v1398
          %v1415 = vpack.c.b16 %v1399, %v1399
          %v1416 = vpack.c.b16 %v1400, %v1400
          %v1417 = vpack.c.b16 %v1401, %v1401
          %v1418 = vpack.c.b16 %v1402, %v1402
          %v1419 = vpack.c.b16 %v1403, %v1403
          %v1420 = vpack.c.b16 %v1404, %v1404
          %v1421 = vpack.c.b16 %v1405, %v1405
          %v1422 = vpack.c.b16 %v1406, %v1406
          %v1423 = vpack.c.b16 %v1407, %v1407
          %v1424 = vpack.c.b16 %v1408, %v1408
          %v1425 = vpack.c.b16 %v1409, %v1409
          %s1442 = sshra.s32 %s389, 3
          %s1443 = sand.u32 %s389, 7
          %s1444 = smul.addr %s1442, 4
          %s1445 = scalar_lea.vmem [#allocation3], %s1444
          %1446 = vst [vmem:[%s1445] sm:$0xf] %v1410
          %1447 = vst [vmem:[%s1445 + $0x4] sm:$0xf] %v1411
          %1448 = vst [vmem:[%s1445 + $0x8] sm:$0xf] %v1412
          %1449 = vst [vmem:[%s1445 + $0xc] sm:$0xf] %v1413
          %1450 = vst [vmem:[%s1445 + $0x10] sm:$0xf] %v1414
          %1451 = vst [vmem:[%s1445 + $0x14] sm:$0xf] %v1415
          %1452 = vst [vmem:[%s1445 + $0x18] sm:$0xf] %v1416
          %1453 = vst [vmem:[%s1445 + $0x1c] sm:$0xf] %v1417
          %1454 = vst [vmem:[%s1445 + $0x20] sm:$0xf] %v1418
          %1455 = vst [vmem:[%s1445 + $0x24] sm:$0xf] %v1419
          %1456 = vst [vmem:[%s1445 + $0x28] sm:$0xf] %v1420
          %1457 = vst [vmem:[%s1445 + $0x2c] sm:$0xf] %v1421
          %1458 = vst [vmem:[%s1445 + $0x30] sm:$0xf] %v1422
          %1459 = vst [vmem:[%s1445 + $0x34] sm:$0xf] %v1423
          %1460 = vst [vmem:[%s1445 + $0x38] sm:$0xf] %v1424
          %1461 = vst [vmem:[%s1445 + $0x3c] sm:$0xf] %v1425
        $region64: #{tpu_custom_call.1} parent=47 // pred_fallthru
          _
        %p1462 = scmp.eq.s32.totalorder %s29, 1
        // Predicated region
        $region65: #{tpu_custom_call.1} parent=47 // pred_check
          %p1463 = pneg %p1462
        $region66: #{tpu_custom_call.1} parent=47 // pred_check_branch
          %1465 = sbr.rel (%p1463) target = $region68
        $region67: #{tpu_custom_call.1} parent=47 // pred_region
          %v1466 = vld [vmem:[#allocation3] sm:$0xf]
          %v1467 = vld [vmem:[#allocation3 + $0x4] sm:$0xf]
          %v1468 = vld [vmem:[#allocation3 + $0x8] sm:$0xf]
          %v1469 = vld [vmem:[#allocation3 + $0xc] sm:$0xf]
          %v1470 = vld [vmem:[#allocation3 + $0x10] sm:$0xf]
          %v1471 = vld [vmem:[#allocation3 + $0x14] sm:$0xf]
          %v1472 = vld [vmem:[#allocation3 + $0x18] sm:$0xf]
          %v1473 = vld [vmem:[#allocation3 + $0x1c] sm:$0xf]
          %v1474 = vld [vmem:[#allocation3 + $0x20] sm:$0xf]
          %v1475 = vld [vmem:[#allocation3 + $0x24] sm:$0xf]
          %v1476 = vld [vmem:[#allocation3 + $0x28] sm:$0xf]
          %v1477 = vld [vmem:[#allocation3 + $0x2c] sm:$0xf]
          %v1478 = vld [vmem:[#allocation3 + $0x30] sm:$0xf]
          %v1479 = vld [vmem:[#allocation3 + $0x34] sm:$0xf]
          %v1480 = vld [vmem:[#allocation3 + $0x38] sm:$0xf]
          %v1481 = vld [vmem:[#allocation3 + $0x3c] sm:$0xf]
          %v1498 = vunpack.c.l.b16 %v407
          %v1499 = vunpack.c.l.b16 %v408
          %v1500 = vunpack.c.l.b16 %v409
          %v1501 = vunpack.c.l.b16 %v410
          %v1502 = vunpack.c.l.b16 %v411
          %v1503 = vunpack.c.l.b16 %v412
          %v1504 = vunpack.c.l.b16 %v413
          %v1505 = vunpack.c.l.b16 %v414
          %v1506 = vunpack.c.l.b16 %v415
          %v1507 = vunpack.c.l.b16 %v416
          %v1508 = vunpack.c.l.b16 %v417
          %v1509 = vunpack.c.l.b16 %v418
          %v1510 = vunpack.c.l.b16 %v419
          %v1511 = vunpack.c.l.b16 %v420
          %v1512 = vunpack.c.l.b16 %v421
          %v1513 = vunpack.c.l.b16 %v422
          %v1514 = vpack.c.b16 %v1499, %v1498
          %v1515 = vpack.c.b16 %v1501, %v1500
          %v1516 = vpack.c.b16 %v1503, %v1502
          %v1517 = vpack.c.b16 %v1505, %v1504
          %v1518 = vpack.c.b16 %v1507, %v1506
          %v1519 = vpack.c.b16 %v1509, %v1508
          %v1520 = vpack.c.b16 %v1511, %v1510
          %v1521 = vpack.c.b16 %v1513, %v1512
          %v1546 = vunpack.c.l.b16 %v1466
          %v1547 = vunpack.c.l.b16 %v1467
          %v1548 = vunpack.c.l.b16 %v1468
          %v1549 = vunpack.c.l.b16 %v1469
          %v1550 = vunpack.c.l.b16 %v1470
          %v1551 = vunpack.c.l.b16 %v1471
          %v1552 = vunpack.c.l.b16 %v1472
          %v1553 = vunpack.c.l.b16 %v1473
          %v1554 = vunpack.c.l.b16 %v1474
          %v1555 = vunpack.c.l.b16 %v1475
          %v1556 = vunpack.c.l.b16 %v1476
          %v1557 = vunpack.c.l.b16 %v1477
          %v1558 = vunpack.c.l.b16 %v1478
          %v1559 = vunpack.c.l.b16 %v1479
          %v1560 = vunpack.c.l.b16 %v1480
          %v1561 = vunpack.c.l.b16 %v1481
          %v1562 = vpack.c.b16 %v1547, %v1546
          %v1563 = vpack.c.b16 %v1549, %v1548
          %v1564 = vpack.c.b16 %v1551, %v1550
          %v1565 = vpack.c.b16 %v1553, %v1552
          %v1566 = vpack.c.b16 %v1555, %v1554
          %v1567 = vpack.c.b16 %v1557, %v1556
          %v1568 = vpack.c.b16 %v1559, %v1558
          %v1569 = vpack.c.b16 %v1561, %v1560
          %1578 = vmatprep.subr.bf16.mxu0 0
          %1579 = vmatpush1.bf16.msra.mxu0 %v1569
          %1580 = vmatprep.subr.bf16.mxu0 0
          %1581 = vmatpush1.bf16.msra.mxu0 %v1568
          %1582 = vmatprep.subr.bf16.mxu0 0
          %1583 = vmatpush1.bf16.msra.mxu0 %v1567
          %1584 = vmatprep.subr.bf16.mxu0 0
          %1585 = vmatpush1.bf16.msra.mxu0 %v1566
          %1586 = vmatprep.subr.bf16.mxu0 0
          %1587 = vmatpush1.bf16.msra.mxu0 %v1565
          %1588 = vmatprep.subr.bf16.mxu0 0
          %1589 = vmatpush1.bf16.msra.mxu0 %v1564
          %1590 = vmatprep.subr.bf16.mxu0 0
          %1591 = vmatpush1.bf16.msra.mxu0 %v1563
          %1592 = vmatprep.subr.bf16.mxu0 0
          %1593 = vmatpush1.bf16.msra.mxu0 %v1562
          %1594 = vmatprep.subr.bf16.mxu0 0
          %1595 = vmatpush2.bf16.msra.mxu0 0
          %1596 = vmatprep.subr.bf16.mxu0 0
          %1597 = vmatpush2.bf16.msra.mxu0 0
          %1598 = vmatprep.subr.bf16.mxu0 0
          %1599 = vmatpush2.bf16.msra.mxu0 0
          %1600 = vmatprep.subr.bf16.mxu0 0
          %1601 = vmatpush2.bf16.msra.mxu0 0
          %1602 = vmatprep.subr.bf16.mxu0 0
          %1603 = vmatpush2.bf16.msra.mxu0 0
          %1604 = vmatprep.subr.bf16.mxu0 0
          %1605 = vmatpush2.bf16.msra.mxu0 0
          %1606 = vmatprep.subr.bf16.mxu0 0
          %1607 = vmatpush2.bf16.msra.mxu0 0
          %1608 = vmatprep.subr.bf16.mxu0 0
          %1609 = vmatpush2.bf16.msra.mxu0 0
          %1610 = vmatprep.mubr.bf16.mxu0 0
          %1611 = vmatmul.mubr.bf16.gmra.mxu0 %v1514
          %v1612 = vpop.f32.mrf.mxu0
          %v1613 = vadd.f32 0.0, %v1612
          %v1614 = vpop.f32.mrf.mxu0
          %v1615 = vpop.f32.mrf.mxu0
          %v1616 = vadd.f32 0.0, %v1615
          %v1617 = vpop.f32.mrf.mxu0
          %1618 = vmatprep.mubr.bf16.mxu0 0
          %1619 = vmatmul.mubr.bf16.gmra.mxu0 %v1515
          %v1620 = vpop.f32.mrf.mxu0
          %v1621 = vadd.f32 0.0, %v1620
          %v1622 = vpop.f32.mrf.mxu0
          %v1623 = vpop.f32.mrf.mxu0
          %v1624 = vadd.f32 0.0, %v1623
          %v1625 = vpop.f32.mrf.mxu0
          %1626 = vmatprep.mubr.bf16.mxu0 0
          %1627 = vmatmul.mubr.bf16.gmra.mxu0 %v1516
          %v1628 = vpop.f32.mrf.mxu0
          %v1629 = vadd.f32 0.0, %v1628
          %v1630 = vpop.f32.mrf.mxu0
          %v1631 = vpop.f32.mrf.mxu0
          %v1632 = vadd.f32 0.0, %v1631
          %v1633 = vpop.f32.mrf.mxu0
          %1634 = vmatprep.mubr.bf16.mxu0 0
          %1635 = vmatmul.mubr.bf16.gmra.mxu0 %v1517
          %v1636 = vpop.f32.mrf.mxu0
          %v1637 = vadd.f32 0.0, %v1636
          %v1638 = vpop.f32.mrf.mxu0
          %v1639 = vpop.f32.mrf.mxu0
          %v1640 = vadd.f32 0.0, %v1639
          %v1641 = vpop.f32.mrf.mxu0
          %1642 = vmatprep.mubr.bf16.mxu0 0
          %1643 = vmatmul.mubr.bf16.gmra.mxu0 %v1518
          %v1644 = vpop.f32.mrf.mxu0
          %v1645 = vadd.f32 0.0, %v1644
          %v1646 = vpop.f32.mrf.mxu0
          %v1647 = vpop.f32.mrf.mxu0
          %v1648 = vadd.f32 0.0, %v1647
          %v1649 = vpop.f32.mrf.mxu0
          %1650 = vmatprep.mubr.bf16.mxu0 0
          %1651 = vmatmul.mubr.bf16.gmra.mxu0 %v1519
          %v1652 = vpop.f32.mrf.mxu0
          %v1653 = vadd.f32 0.0, %v1652
          %v1654 = vpop.f32.mrf.mxu0
          %v1655 = vpop.f32.mrf.mxu0
          %v1656 = vadd.f32 0.0, %v1655
          %v1657 = vpop.f32.mrf.mxu0
          %1658 = vmatprep.mubr.bf16.mxu0 0
          %1659 = vmatmul.mubr.bf16.gmra.mxu0 %v1520
          %v1660 = vpop.f32.mrf.mxu0
          %v1661 = vadd.f32 0.0, %v1660
          %v1662 = vpop.f32.mrf.mxu0
          %v1663 = vpop.f32.mrf.mxu0
          %v1664 = vadd.f32 0.0, %v1663
          %v1665 = vpop.f32.mrf.mxu0
          %1666 = vmatprep.mubr.bf16.mxu0 0
          %1667 = vmatmul.mubr.bf16.gmra.mxu0 %v1521
          %v1668 = vpop.f32.mrf.mxu0
          %v1669 = vadd.f32 0.0, %v1668
          %v1670 = vpop.f32.mrf.mxu0
          %v1671 = vpop.f32.mrf.mxu0
          %v1672 = vadd.f32 0.0, %v1671
          %v1673 = vpop.f32.mrf.mxu0
          %1674 = vdwg.mxu0
          %1676 = vset.pattern.permute.xlu0 0
          %1677 = vperm.xlu0 %1676, %v391
          %v1678 = vpop.permute.xlu0 %1677
          %1681 = vset.pattern.permute.xlu0 0
          %1682 = vperm.xlu0 %1681, %v392
          %v1683 = vpop.permute.xlu0 %1682
          %1686 = vset.pattern.permute.xlu0 0
          %1687 = vperm.xlu0 %1686, %v393
          %v1688 = vpop.permute.xlu0 %1687
          %1691 = vset.pattern.permute.xlu0 0
          %1692 = vperm.xlu0 %1691, %v394
          %v1693 = vpop.permute.xlu0 %1692
          %1696 = vset.pattern.permute.xlu0 0
          %1697 = vperm.xlu0 %1696, %v395
          %v1698 = vpop.permute.xlu0 %1697
          %1701 = vset.pattern.permute.xlu0 0
          %1702 = vperm.xlu0 %1701, %v396
          %v1703 = vpop.permute.xlu0 %1702
          %1706 = vset.pattern.permute.xlu0 0
          %1707 = vperm.xlu0 %1706, %v397
          %v1708 = vpop.permute.xlu0 %1707
          %1711 = vset.pattern.permute.xlu0 0
          %1712 = vperm.xlu0 %1711, %v398
          %v1713 = vpop.permute.xlu0 %1712
          %1716 = vset.pattern.permute.xlu0 0
          %1717 = vperm.xlu0 %1716, %v399
          %v1718 = vpop.permute.xlu0 %1717
          %1721 = vset.pattern.permute.xlu0 0
          %1722 = vperm.xlu0 %1721, %v400
          %v1723 = vpop.permute.xlu0 %1722
          %1726 = vset.pattern.permute.xlu0 0
          %1727 = vperm.xlu0 %1726, %v401
          %v1728 = vpop.permute.xlu0 %1727
          %1731 = vset.pattern.permute.xlu0 0
          %1732 = vperm.xlu0 %1731, %v402
          %v1733 = vpop.permute.xlu0 %1732
          %1736 = vset.pattern.permute.xlu0 0
          %1737 = vperm.xlu0 %1736, %v403
          %v1738 = vpop.permute.xlu0 %1737
          %1741 = vset.pattern.permute.xlu0 0
          %1742 = vperm.xlu0 %1741, %v404
          %v1743 = vpop.permute.xlu0 %1742
          %1746 = vset.pattern.permute.xlu0 0
          %1747 = vperm.xlu0 %1746, %v405
          %v1748 = vpop.permute.xlu0 %1747
          %1751 = vset.pattern.permute.xlu0 0
          %1752 = vperm.xlu0 %1751, %v406
          %v1753 = vpop.permute.xlu0 %1752
          %v1755 = vmul.f32 %v1678, %v1613
          %v1756 = vmul.f32 %v1683, %v1616
          %v1757 = vmul.f32 %v1688, %v1621
          %v1758 = vmul.f32 %v1693, %v1624
          %v1759 = vmul.f32 %v1698, %v1629
          %v1760 = vmul.f32 %v1703, %v1632
          %v1761 = vmul.f32 %v1708, %v1637
          %v1762 = vmul.f32 %v1713, %v1640
          %v1763 = vmul.f32 %v1718, %v1645
          %v1764 = vmul.f32 %v1723, %v1648
          %v1765 = vmul.f32 %v1728, %v1653
          %v1766 = vmul.f32 %v1733, %v1656
          %v1767 = vmul.f32 %v1738, %v1661
          %v1768 = vmul.f32 %v1743, %v1664
          %v1769 = vmul.f32 %v1748, %v1669
          %v1770 = vmul.f32 %v1753, %v1672
          %v1771 = vld [vmem:[%s6] sm:$0x1]
          %v1773 = vlaneseq
          %v1774 = vshrl.u32 %v1773, 7
          %v1775 = vsub.s32 0, %v1774
          %v1776 = vrot.slane %v1771, %v1775
          %v1778 = vadd.f32 %v1755, %v1776
          %v1779 = vadd.f32 %v1756, %v1776
          %v1780 = vadd.f32 %v1757, %v1776
          %v1781 = vadd.f32 %v1758, %v1776
          %v1782 = vadd.f32 %v1759, %v1776
          %v1783 = vadd.f32 %v1760, %v1776
          %v1784 = vadd.f32 %v1761, %v1776
          %v1785 = vadd.f32 %v1762, %v1776
          %v1786 = vadd.f32 %v1763, %v1776
          %v1787 = vadd.f32 %v1764, %v1776
          %v1788 = vadd.f32 %v1765, %v1776
          %v1789 = vadd.f32 %v1766, %v1776
          %v1790 = vadd.f32 %v1767, %v1776
          %v1791 = vadd.f32 %v1768, %v1776
          %v1792 = vadd.f32 %v1769, %v1776
          %v1793 = vadd.f32 %v1770, %v1776
          %v1794 = vmax.f32 %v1778, 0.0
          %v1795 = vmax.f32 %v1779, 0.0
          %v1796 = vmax.f32 %v1780, 0.0
          %v1797 = vmax.f32 %v1781, 0.0
          %v1798 = vmax.f32 %v1782, 0.0
          %v1799 = vmax.f32 %v1783, 0.0
          %v1800 = vmax.f32 %v1784, 0.0
          %v1801 = vmax.f32 %v1785, 0.0
          %v1802 = vmax.f32 %v1786, 0.0
          %v1803 = vmax.f32 %v1787, 0.0
          %v1804 = vmax.f32 %v1788, 0.0
          %v1805 = vmax.f32 %v1789, 0.0
          %v1806 = vmax.f32 %v1790, 0.0
          %v1807 = vmax.f32 %v1791, 0.0
          %v1808 = vmax.f32 %v1792, 0.0
          %v1809 = vmax.f32 %v1793, 0.0
          %1810 = vst [vmem:[%s365] sm:$0xff] %v1794
          %1811 = vst [vmem:[%s365 + $0x8] sm:$0xff] %v1795
          %1812 = vst [vmem:[%s365 + $0x10] sm:$0xff] %v1796
          %1813 = vst [vmem:[%s365 + $0x18] sm:$0xff] %v1797
          %1814 = vst [vmem:[%s365 + $0x20] sm:$0xff] %v1798
          %1815 = vst [vmem:[%s365 + $0x28] sm:$0xff] %v1799
          %1816 = vst [vmem:[%s365 + $0x30] sm:$0xff] %v1800
          %1817 = vst [vmem:[%s365 + $0x38] sm:$0xff] %v1801
          %1818 = vst [vmem:[%s365 + $0x40] sm:$0xff] %v1802
          %1819 = vst [vmem:[%s365 + $0x48] sm:$0xff] %v1803
          %1820 = vst [vmem:[%s365 + $0x50] sm:$0xff] %v1804
          %1821 = vst [vmem:[%s365 + $0x58] sm:$0xff] %v1805
          %1822 = vst [vmem:[%s365 + $0x60] sm:$0xff] %v1806
          %1823 = vst [vmem:[%s365 + $0x68] sm:$0xff] %v1807
          %1824 = vst [vmem:[%s365 + $0x70] sm:$0xff] %v1808
          %1825 = vst [vmem:[%s365 + $0x78] sm:$0xff] %v1809
        $region68: #{tpu_custom_call.1} parent=47 // pred_fallthru
          _
        %s1826 = sand.u32 %s218, 1
        %s1827 = scalar_lea.sflag [#allocation6], %s1826
        %s1828 = sand.u32 %s218, 1
        %s1829 = smul.addr %s1828, 128
        %s1830 = scalar_lea.vmem [#allocation9], %s1829
        // Predicated region
        $region69: #{tpu_custom_call.1} parent=47 // pred_check
          %p1831 = pneg %p228
        $region70: #{tpu_custom_call.1} parent=47 // pred_check_branch
          %1833 = sbr.rel (%p1831) target = $region72
        $region71: #{tpu_custom_call.1} parent=47 // pred_region
          %s1834 = smul.u32 %s30, %s29
          %s1835 = smul.u32 16, %s1834
          %s1837 = ssub.s32 2048, 2048
          %1838 = vsyncadd %s1827, %s1837
          %s1839 = smul.addr %s28, 16
          %s1840 = sadd.s32 %s1835, %s1839
          %s1841 = smul.addr %s1840, 128
          %s1842 = scalar_lea.hbm %s7, %s1841
          %s1843 = sshll.u32 %s1830, 4
          %s1844 = int_to_ptr.vmem [resolvable:$true] %s1843
          %1849 = dma.vmem_to_hbm [thread:$0]  %s1844, 2048, %s1842, %s1827, 128, 128, 8
        $region72: #{tpu_custom_call.1} parent=47 // pred_fallthru
          _
      $region48: #{tpu_custom_call.1} parent=5 // pred_fallthru
        _
      %p1850 = scmp.le.s32.totalorder 2, %s18
      // Predicated region
      $region73: #{tpu_custom_call.1} parent=5 // pred_check
        %p1851 = pneg %p1850
      $region74: #{tpu_custom_call.1} parent=5 // pred_check_branch
        %1853 = sbr.rel (%p1851) target = $region76
      $region75: #{tpu_custom_call.1} parent=5 // pred_region
        %s1854 = ssub.s32 %s18, 2
        // Predicated region
        $region77: #{tpu_custom_call.1} parent=75 // pred_check
          %p1855 = pneg %p234
        $region78: #{tpu_custom_call.1} parent=75 // pred_check_branch
          %1857 = sbr.rel (%p1855) target = $region80
        $region79: #{tpu_custom_call.1} parent=75 // pred_region
          %s1858 = sand.u32 %s219, 1
          %s1859 = scalar_lea.sflag [#allocation6], %s1858
          %s1860 = sand.u32 %s219, 1
          %s1861 = smul.addr %s1860, 128
          %s1862 = scalar_lea.vmem [#allocation9], %s1861
          %1863 = dma.done %s1859, 2048
        $region80: #{tpu_custom_call.1} parent=75 // pred_fallthru
          _
      $region76: #{tpu_custom_call.1} parent=5 // pred_fallthru
        _
    $region6: #{tpu_custom_call.1} parent=1 // loop_footer
      %s22 = sadd.s32 1, %s18
    $region7: #{tpu_custom_call.1} parent=1 // loop_footer_branch
      %17 = sbr.rel target = $region3
    $region8: #{tpu_custom_call.1} parent=1 // loop_exit
      _
    %1864 = vsyncpa [#allocation5], 1
    %s1865 = scalar_lea.sflag [#allocation5], 1
    %1866 = vsyncpa %s1865, 1
    %1867 = vsyncpa [#allocation8], 1
    %1868 = vsyncpa [#allocation6], 1
    %s1869 = scalar_lea.sflag [#allocation6], 1
    %1870 = vsyncpa %s1869, 1

</llo_original>
